<compile_context>
chip_gen: v6e
topology: v6e:2x2x1
jax: 0.10.0
libtpu: 0.0.40
codegen_flags: <defaults>
</compile_context>

<pallas_src>
import functools
import math

import numpy as np
import jax
import jax.numpy as jnp
from jax import lax
from jax.experimental import pallas as pl
from jax.experimental.pallas import tpu as pltpu

H = 50        # LSTM hidden size (from the module)
HP = 128      # hidden size padded to lane width
G = 4 * HP    # padded gate width (i|f|g|o slabs)
OUT = 2       # fc output features
OUTP = 128    # fc output padded to lane width


def lstm_kernel(x_ref, whht_ref, fcwt_ref, fcb_ref, out_ref, *, gate_bf16):
    # x_ref   : (T, BT)    f32, time-major for this batch tile
    # whht_ref: (HP, G)    bf16, [W_hh^T ; w_ih (row 50) ; b_ih+b_hh (row 51)]
    #                      with the 0.5 sigmoid pre-scale folded into i/f/o cols
    # fcwt_ref: (HP, OUTP) bf16, fc_W^T
    # fcb_ref : (1, OUTP)  f32
    # out_ref : (BT, OUTP) f32
    T, BT = x_ref.shape

    whht = whht_ref[...]                                  # (HP, G) bf16, loop-invariant

    # Hoisted loop-invariant masks (JAX does not CSE broadcasts/iotas).
    lane = lax.broadcasted_iota(jnp.int32, (BT, HP), 1)
    mask_x = lane == H            # lane 50 of the LHS carries x_t
    mask_one = lane == H + 1      # lane 51 carries the 1.0 bias multiplier

    act_dtype = jnp.bfloat16 if gate_bf16 else jnp.float32

    def sigm_half(v):
        # i/f/o pre-activations already carry the 0.5 pre-scale (folded into the
        # weights), so sigmoid(x) = 0.5*tanh(0.5x)+0.5 = 0.5*tanh(v)+0.5 here.
        return 0.5 * jnp.tanh(v) + 0.5

    def step(t, carry):
        h, c = carry                                      # f32, vreg-resident state
        x_t = x_ref[t]                                    # (BT,) lane vector
        xcol = x_t[:, None]                               # (BT, 1) column
        # Augment h with [x_t, 1.0] in the padded K lanes; one MXU pass then
        # yields W_hh^T h + w_ih x_t + b for all four gate slabs.
        lhs = jnp.where(mask_x, xcol, jnp.where(mask_one, 1.0, h))
        gates = jnp.dot(lhs.astype(jnp.bfloat16), whht,   # bf16 MXU, f32 accumulate
                        preferred_element_type=jnp.float32)
        ga = gates.astype(act_dtype)                      # bf16 EUP on v6e/v7x
        i = sigm_half(ga[:, 0 * HP:1 * HP]).astype(jnp.float32)
        f = sigm_half(ga[:, 1 * HP:2 * HP]).astype(jnp.float32)
        g = jnp.tanh(ga[:, 2 * HP:3 * HP]).astype(jnp.float32)
        o = sigm_half(ga[:, 3 * HP:4 * HP]).astype(jnp.float32)
        c = f * c + i * g                                 # f32 state update
        h = o * jnp.tanh(c.astype(act_dtype)).astype(jnp.float32)
        return (h, c)

    h0 = jnp.zeros((BT, HP), jnp.float32)
    c0 = jnp.zeros((BT, HP), jnp.float32)
    if BT <= 32:
        unroll = True if T <= 16 else 8
    else:
        unroll = 2   # large tiles: gates alone are ~64 vregs; keep spills down
    h, _ = lax.fori_loop(0, T, step, (h0, c0), unroll=unroll)

    # fc on the last hidden state: out = h_T @ fc_W^T + fc_b (bias exact in f32)
    out_ref[...] = (jnp.dot(h.astype(jnp.bfloat16), fcwt_ref[...],
                            preferred_element_type=jnp.float32)
                    + fcb_ref[...])


def _prep_combined_weights(w_ih, w_hh, b_ih, b_hh):
    """Build the (HP, G) bf16 combined recurrence operand.

    Rows 0..H-1 : W_hh^T (per gate, padded to HP columns)
    Row  H      : w_ih   (input_size == 1)
    Row  H+1    : b_ih + b_hh
    Rows H+2..  : zero
    i/f/o gate columns are pre-scaled by 0.5 (sigmoid-as-tanh identity).
    Padded gate columns stay exactly zero so padded c/h stay exactly zero.
    """
    b = b_ih + b_hh
    comb = jnp.zeros((HP, G), jnp.float32)
    for gi in range(4):
        rows = slice(gi * H, (gi + 1) * H)
        col0 = gi * HP
        comb = comb.at[0:H, col0:col0 + H].set(w_hh[rows, :].T)
        comb = comb.at[H, col0:col0 + H].set(w_ih[rows, 0])
        comb = comb.at[H + 1, col0:col0 + H].set(b[rows])
    scale = jnp.ones((1, G), jnp.float32)
    for gi in (0, 1, 3):                       # i, f, o (g stays unscaled)
        scale = scale.at[0, gi * HP:(gi + 1) * HP].set(0.5)
    return (comb * scale).astype(jnp.bfloat16)


def _batch_tiling(B):
    """Pick (batch tile BT multiple of 8, #tiles NB).

    NB >= 2 whenever B > 8 so the "parallel" grid axis can shard across the two
    TensorCores on v7x; BT capped at 128 (MXU M rows).  (On v6e/v7x BT=256 for
    very large B could amortize per-step overhead further; kept at 128 here to
    bound vreg/VMEM pressure of the unrolled loop body.)
    """
    BT_MAX = 128
    if B <= 8:
        return 8, 1
    nb = max(2, math.ceil(B / BT_MAX))
    bt = math.ceil(math.ceil(B / nb) / 8) * 8
    return bt, nb


def _use_bf16_gates():
    """bf16 gate nonlinearities on chips with bf16 EUP/VPU (v6e, v7x)."""
    try:
        kind = jax.devices()[0].device_kind.lower()
    except Exception:
        return False
    return not any(s in kind for s in ("v2", "v3", "v4", "v5"))


@jax.jit
def lstm_net_forward(x, params):
    """x: (batch, seq) float32  ->  (batch, 2) float32  (matches LSTMNet.forward)."""
    w_ih, w_hh, b_ih, b_hh, fc_w, fc_b = params
    B, T = x.shape
    BT, NB = _batch_tiling(B)
    BP = BT * NB

    # Parameter padding / layout prep (plain-JAX glue).
    whht_p = _prep_combined_weights(w_ih, w_hh, b_ih, b_hh)             # (HP, G) bf16
    fcwt_p = (jnp.zeros((HP, OUTP), jnp.float32)
              .at[:H, :OUT].set(fc_w.T)).astype(jnp.bfloat16)           # (HP, OUTP) bf16
    fcb_p = jnp.zeros((1, OUTP), jnp.float32).at[0, :OUT].set(fc_b)     # (1, OUTP) f32

    # x.unsqueeze(2) in torch just makes input_size=1; here x is folded into the
    # recurrence matmul via the padded K lanes inside the kernel.
    x_pad = jnp.zeros((BP, T), jnp.float32).at[:B, :].set(x)
    x_p = x_pad.reshape(NB, BT, T).transpose(0, 2, 1)                   # (NB, T, BT)
    # NOTE: for very long T on v7x (64 MiB VMEM), pass x as bf16 and/or set
    # vmem_limit_bytes; for typical sequence lengths the default is ample.

    gate_bf16 = _use_bf16_gates()

    out_p = pl.pallas_call(
        functools.partial(lstm_kernel, gate_bf16=gate_bf16),
        out_shape=jax.ShapeDtypeStruct((NB, BT, OUTP), jnp.float32),
        grid=(NB,),
        in_specs=[
            pl.BlockSpec((None, T, BT), lambda b: (b, 0, 0)),   # x tile (time-major)
            pl.BlockSpec((HP, G), lambda b: (0, 0)),            # combined W (bf16)
            pl.BlockSpec((HP, OUTP), lambda b: (0, 0)),         # fc_W^T (bf16)
            pl.BlockSpec((1, OUTP), lambda b: (0, 0)),          # fc_b
        ],
        out_specs=pl.BlockSpec((None, BT, OUTP), lambda b: (b, 0, 0)),
        compiler_params=pltpu.CompilerParams(
            dimension_semantics=("parallel",)),                 # batch tiles independent
    )(x_p, whht_p, fcwt_p, fcb_p)

    return out_p.reshape(BP, OUTP)[:B, :OUT]


def ref_forward(x, params):
    """Pure-JAX f32 reference mirroring torch LSTM + Linear semantics."""
    w_ih, w_hh, b_ih, b_hh, fc_w, fc_b = params
    B, T = x.shape
    h = jnp.zeros((B, H), jnp.float32)
    c = jnp.zeros((B, H), jnp.float32)
    for t in range(T):
        x_t = x[:, t:t + 1]                                  # (B, 1)
        gates = x_t @ w_ih.T + h @ w_hh.T + b_ih + b_hh      # (B, 4H)
        i = jax.nn.sigmoid(gates[:, 0 * H:1 * H])
        f = jax.nn.sigmoid(gates[:, 1 * H:2 * H])
        g = jnp.tanh(gates[:, 2 * H:3 * H])
        o = jax.nn.sigmoid(gates[:, 3 * H:4 * H])
        c = f * c + i * g
        h = o * jnp.tanh(c)
    return h @ fc_w.T + fc_b


def init_params(key):
    # torch defaults: LSTM & Linear params ~ U(-1/sqrt(hidden), 1/sqrt(hidden))
    k = 1.0 / math.sqrt(H)
    ks = jax.random.split(key, 6)
    w_ih = jax.random.uniform(ks[0], (4 * H, 1), jnp.float32, -k, k)
    w_hh = jax.random.uniform(ks[1], (4 * H, H), jnp.float32, -k, k)
    b_ih = jax.random.uniform(ks[2], (4 * H,), jnp.float32, -k, k)
    b_hh = jax.random.uniform(ks[3], (4 * H,), jnp.float32, -k, k)
    fc_w = jax.random.uniform(ks[4], (OUT, H), jnp.float32, -k, k)
    fc_b = jax.random.uniform(ks[5], (OUT,), jnp.float32, -k, k)
    return (w_ih, w_hh, b_ih, b_hh, fc_w, fc_b)


if __name__ == "__main__":
    key = jax.random.PRNGKey(0)
    k_param, k_x = jax.random.split(key)
    params = init_params(k_param)

    batch, seq = 2, 8
    x = jax.random.normal(k_x, (batch, seq), jnp.float32)

    out = lstm_net_forward(x, params)
    out = jax.block_until_ready(out)

    ref = ref_forward(x, params)
    # Tolerance accounts for bf16 MXU operands (weights / bias / x folded into
    # the combined matrix) and bf16 gate nonlinearities on v6e/v7x; observed
    # error is O(1e-3), well inside 2e-2.
    np.testing.assert_allclose(np.asarray(out), np.asarray(ref),
                               rtol=2e-2, atol=2e-2)
    assert out.shape == (batch, OUT)
    print("KERNEL_OK")
</pallas_src>

<mosaic_0001>
module attributes {stable_mosaic.version = 11 : i64} {
  func.func @lstm_kernel(%arg0: i32, %arg1: memref<1x8x8xf32, #tpu.memory_space<vmem>>, %arg2: memref<128x512xbf16, #tpu.memory_space<vmem>>, %arg3: memref<128x128xbf16, #tpu.memory_space<vmem>>, %arg4: memref<1x128xf32, #tpu.memory_space<vmem>>, %arg5: memref<1x8x128xf32, #tpu.memory_space<vmem>>) attributes {dimension_semantics = [#tpu.dimension_semantics<parallel>], iteration_bounds = array<i64: 1>, scalar_prefetch = 0 : i64, scratch_operands = 0 : i64, tpu.core_type = #tpu.core_type<tc>, window_params = [{transform_indices = @transform_0, window_bounds = array<i64: 1, 8, 8>}, {pipeline_mode = #tpu.pipeline_mode<synchronous>, transform_indices = @transform_1, window_bounds = array<i64: 128, 512>}, {pipeline_mode = #tpu.pipeline_mode<synchronous>, transform_indices = @transform_2, window_bounds = array<i64: 128, 128>}, {pipeline_mode = #tpu.pipeline_mode<synchronous>, transform_indices = @transform_3, window_bounds = array<i64: 1, 128>}, {transform_indices = @transform_4, window_bounds = array<i64: 1, 8, 128>}]} {
    %c0 = arith.constant 0 : index
    %c0_0 = arith.constant 0 : index
    %0 = vector.load %arg2[%c0, %c0_0] : memref<128x512xbf16, #tpu.memory_space<vmem>>, vector<128x512xbf16>
    %1 = tpu.iota {dimensions = array<i32: 1>} : vector<8x128xi32>
    %c50_i32 = arith.constant 50 : i32
    %2 = vector.broadcast %c50_i32 : i32 to vector<8x128xi32>
    %3 = arith.cmpi eq, %1, %2 : vector<8x128xi32>
    %c51_i32 = arith.constant 51 : i32
    %4 = vector.broadcast %c51_i32 : i32 to vector<8x128xi32>
    %5 = arith.cmpi eq, %1, %4 : vector<8x128xi32>
    %cst = arith.constant 0.000000e+00 : f32
    %6 = vector.broadcast %cst : f32 to vector<8x128xf32>
    %cst_1 = arith.constant 0.000000e+00 : f32
    %7 = vector.broadcast %cst_1 : f32 to vector<8x128xf32>
    %c0_i32 = arith.constant 0 : i32
    %c0_2 = arith.constant 0 : index
    %8 = arith.index_cast %c0_i32 : i32 to index
    %c0_3 = arith.constant 0 : index
    %9 = vector.load %arg1[%c0_2, %8, %c0_3] : memref<1x8x8xf32, #tpu.memory_space<vmem>>, vector<1x1x8xf32>
    %10 = vector.shape_cast %9 : vector<1x1x8xf32> to vector<8xf32>
    %11 = vector.shape_cast %10 : vector<8xf32> to vector<8x1xf32>
    %cst_4 = arith.constant 1.000000e+00 : f32
    %12 = vector.broadcast %cst_4 : f32 to vector<8x128xf32>
    %13 = arith.select %5, %12, %6 : vector<8x128xi1>, vector<8x128xf32>
    %14 = vector.shape_cast %11 : vector<8x1xf32> to vector<8x1xf32>
    %15 = vector.broadcast %14 : vector<8x1xf32> to vector<8x128xf32>
    %16 = arith.select %3, %15, %13 : vector<8x128xi1>, vector<8x128xf32>
    %17 = arith.truncf %16 : vector<8x128xf32> to vector<8x128xbf16>
    %cst_5 = arith.constant dense<0.000000e+00> : vector<8x512xf32>
    %18 = tpu.matmul %17, %0, %cst_5 {dimension_numbers = #tpu.dot_dimension_numbers<[1], [0], [0], [1], [0, 0, 1, 1], [], []>} : vector<8x128xbf16>, vector<128x512xbf16>, vector<8x512xf32> -> vector<8x512xf32>
    %19 = arith.truncf %18 : vector<8x512xf32> to vector<8x512xbf16>
    %20 = vector.extract_strided_slice %19 {offsets = [0, 0], sizes = [8, 128], strides = [1, 1]} : vector<8x512xbf16> to vector<8x128xbf16>
    %21 = math.tanh %20 : vector<8x128xbf16>
    %cst_6 = arith.constant 5.000000e-01 : bf16
    %22 = vector.broadcast %cst_6 : bf16 to vector<8x128xbf16>
    %23 = arith.mulf %22, %21 : vector<8x128xbf16>
    %cst_7 = arith.constant 5.000000e-01 : bf16
    %24 = vector.broadcast %cst_7 : bf16 to vector<8x128xbf16>
    %25 = arith.addf %23, %24 : vector<8x128xbf16>
    %26 = arith.extf %25 : vector<8x128xbf16> to vector<8x128xf32>
    %27 = vector.extract_strided_slice %19 {offsets = [0, 128], sizes = [8, 128], strides = [1, 1]} : vector<8x512xbf16> to vector<8x128xbf16>
    %28 = math.tanh %27 : vector<8x128xbf16>
    %cst_8 = arith.constant 5.000000e-01 : bf16
    %29 = vector.broadcast %cst_8 : bf16 to vector<8x128xbf16>
    %30 = arith.mulf %29, %28 : vector<8x128xbf16>
    %cst_9 = arith.constant 5.000000e-01 : bf16
    %31 = vector.broadcast %cst_9 : bf16 to vector<8x128xbf16>
    %32 = arith.addf %30, %31 : vector<8x128xbf16>
    %33 = arith.extf %32 : vector<8x128xbf16> to vector<8x128xf32>
    %34 = vector.extract_strided_slice %19 {offsets = [0, 256], sizes = [8, 128], strides = [1, 1]} : vector<8x512xbf16> to vector<8x128xbf16>
    %35 = math.tanh %34 : vector<8x128xbf16>
    %36 = arith.extf %35 : vector<8x128xbf16> to vector<8x128xf32>
    %37 = vector.extract_strided_slice %19 {offsets = [0, 384], sizes = [8, 128], strides = [1, 1]} : vector<8x512xbf16> to vector<8x128xbf16>
    %38 = math.tanh %37 : vector<8x128xbf16>
    %cst_10 = arith.constant 5.000000e-01 : bf16
    %39 = vector.broadcast %cst_10 : bf16 to vector<8x128xbf16>
    %40 = arith.mulf %39, %38 : vector<8x128xbf16>
    %cst_11 = arith.constant 5.000000e-01 : bf16
    %41 = vector.broadcast %cst_11 : bf16 to vector<8x128xbf16>
    %42 = arith.addf %40, %41 : vector<8x128xbf16>
    %43 = arith.extf %42 : vector<8x128xbf16> to vector<8x128xf32>
    %44 = arith.mulf %33, %7 : vector<8x128xf32>
    %45 = arith.mulf %26, %36 : vector<8x128xf32>
    %46 = arith.addf %44, %45 : vector<8x128xf32>
    %47 = arith.truncf %46 : vector<8x128xf32> to vector<8x128xbf16>
    %48 = math.tanh %47 : vector<8x128xbf16>
    %49 = arith.extf %48 : vector<8x128xbf16> to vector<8x128xf32>
    %50 = arith.mulf %43, %49 : vector<8x128xf32>
    %c1_i32 = arith.constant 1 : i32
    %c0_12 = arith.constant 0 : index
    %51 = arith.index_cast %c1_i32 : i32 to index
    %c0_13 = arith.constant 0 : index
    %52 = vector.load %arg1[%c0_12, %51, %c0_13] : memref<1x8x8xf32, #tpu.memory_space<vmem>>, vector<1x1x8xf32>
    %53 = vector.shape_cast %52 : vector<1x1x8xf32> to vector<8xf32>
    %54 = vector.shape_cast %53 : vector<8xf32> to vector<8x1xf32>
    %cst_14 = arith.constant 1.000000e+00 : f32
    %55 = vector.broadcast %cst_14 : f32 to vector<8x128xf32>
    %56 = arith.select %5, %55, %50 : vector<8x128xi1>, vector<8x128xf32>
    %57 = vector.shape_cast %54 : vector<8x1xf32> to vector<8x1xf32>
    %58 = vector.broadcast %57 : vector<8x1xf32> to vector<8x128xf32>
    %59 = arith.select %3, %58, %56 : vector<8x128xi1>, vector<8x128xf32>
    %60 = arith.truncf %59 : vector<8x128xf32> to vector<8x128xbf16>
    %cst_15 = arith.constant dense<0.000000e+00> : vector<8x512xf32>
    %61 = tpu.matmul %60, %0, %cst_15 {dimension_numbers = #tpu.dot_dimension_numbers<[1], [0], [0], [1], [0, 0, 1, 1], [], []>} : vector<8x128xbf16>, vector<128x512xbf16>, vector<8x512xf32> -> vector<8x512xf32>
    %62 = arith.truncf %61 : vector<8x512xf32> to vector<8x512xbf16>
    %63 = vector.extract_strided_slice %62 {offsets = [0, 0], sizes = [8, 128], strides = [1, 1]} : vector<8x512xbf16> to vector<8x128xbf16>
    %64 = math.tanh %63 : vector<8x128xbf16>
    %cst_16 = arith.constant 5.000000e-01 : bf16
    %65 = vector.broadcast %cst_16 : bf16 to vector<8x128xbf16>
    %66 = arith.mulf %65, %64 : vector<8x128xbf16>
    %cst_17 = arith.constant 5.000000e-01 : bf16
    %67 = vector.broadcast %cst_17 : bf16 to vector<8x128xbf16>
    %68 = arith.addf %66, %67 : vector<8x128xbf16>
    %69 = arith.extf %68 : vector<8x128xbf16> to vector<8x128xf32>
    %70 = vector.extract_strided_slice %62 {offsets = [0, 128], sizes = [8, 128], strides = [1, 1]} : vector<8x512xbf16> to vector<8x128xbf16>
    %71 = math.tanh %70 : vector<8x128xbf16>
    %cst_18 = arith.constant 5.000000e-01 : bf16
    %72 = vector.broadcast %cst_18 : bf16 to vector<8x128xbf16>
    %73 = arith.mulf %72, %71 : vector<8x128xbf16>
    %cst_19 = arith.constant 5.000000e-01 : bf16
    %74 = vector.broadcast %cst_19 : bf16 to vector<8x128xbf16>
    %75 = arith.addf %73, %74 : vector<8x128xbf16>
    %76 = arith.extf %75 : vector<8x128xbf16> to vector<8x128xf32>
    %77 = vector.extract_strided_slice %62 {offsets = [0, 256], sizes = [8, 128], strides = [1, 1]} : vector<8x512xbf16> to vector<8x128xbf16>
    %78 = math.tanh %77 : vector<8x128xbf16>
    %79 = arith.extf %78 : vector<8x128xbf16> to vector<8x128xf32>
    %80 = vector.extract_strided_slice %62 {offsets = [0, 384], sizes = [8, 128], strides = [1, 1]} : vector<8x512xbf16> to vector<8x128xbf16>
    %81 = math.tanh %80 : vector<8x128xbf16>
    %cst_20 = arith.constant 5.000000e-01 : bf16
    %82 = vector.broadcast %cst_20 : bf16 to vector<8x128xbf16>
    %83 = arith.mulf %82, %81 : vector<8x128xbf16>
    %cst_21 = arith.constant 5.000000e-01 : bf16
    %84 = vector.broadcast %cst_21 : bf16 to vector<8x128xbf16>
    %85 = arith.addf %83, %84 : vector<8x128xbf16>
    %86 = arith.extf %85 : vector<8x128xbf16> to vector<8x128xf32>
    %87 = arith.mulf %76, %46 : vector<8x128xf32>
    %88 = arith.mulf %69, %79 : vector<8x128xf32>
    %89 = arith.addf %87, %88 : vector<8x128xf32>
    %90 = arith.truncf %89 : vector<8x128xf32> to vector<8x128xbf16>
    %91 = math.tanh %90 : vector<8x128xbf16>
    %92 = arith.extf %91 : vector<8x128xbf16> to vector<8x128xf32>
    %93 = arith.mulf %86, %92 : vector<8x128xf32>
    %c2_i32 = arith.constant 2 : i32
    %c0_22 = arith.constant 0 : index
    %94 = arith.index_cast %c2_i32 : i32 to index
    %c0_23 = arith.constant 0 : index
    %95 = vector.load %arg1[%c0_22, %94, %c0_23] : memref<1x8x8xf32, #tpu.memory_space<vmem>>, vector<1x1x8xf32>
    %96 = vector.shape_cast %95 : vector<1x1x8xf32> to vector<8xf32>
    %97 = vector.shape_cast %96 : vector<8xf32> to vector<8x1xf32>
    %cst_24 = arith.constant 1.000000e+00 : f32
    %98 = vector.broadcast %cst_24 : f32 to vector<8x128xf32>
    %99 = arith.select %5, %98, %93 : vector<8x128xi1>, vector<8x128xf32>
    %100 = vector.shape_cast %97 : vector<8x1xf32> to vector<8x1xf32>
    %101 = vector.broadcast %100 : vector<8x1xf32> to vector<8x128xf32>
    %102 = arith.select %3, %101, %99 : vector<8x128xi1>, vector<8x128xf32>
    %103 = arith.truncf %102 : vector<8x128xf32> to vector<8x128xbf16>
    %cst_25 = arith.constant dense<0.000000e+00> : vector<8x512xf32>
    %104 = tpu.matmul %103, %0, %cst_25 {dimension_numbers = #tpu.dot_dimension_numbers<[1], [0], [0], [1], [0, 0, 1, 1], [], []>} : vector<8x128xbf16>, vector<128x512xbf16>, vector<8x512xf32> -> vector<8x512xf32>
    %105 = arith.truncf %104 : vector<8x512xf32> to vector<8x512xbf16>
    %106 = vector.extract_strided_slice %105 {offsets = [0, 0], sizes = [8, 128], strides = [1, 1]} : vector<8x512xbf16> to vector<8x128xbf16>
    %107 = math.tanh %106 : vector<8x128xbf16>
    %cst_26 = arith.constant 5.000000e-01 : bf16
    %108 = vector.broadcast %cst_26 : bf16 to vector<8x128xbf16>
    %109 = arith.mulf %108, %107 : vector<8x128xbf16>
    %cst_27 = arith.constant 5.000000e-01 : bf16
    %110 = vector.broadcast %cst_27 : bf16 to vector<8x128xbf16>
    %111 = arith.addf %109, %110 : vector<8x128xbf16>
    %112 = arith.extf %111 : vector<8x128xbf16> to vector<8x128xf32>
    %113 = vector.extract_strided_slice %105 {offsets = [0, 128], sizes = [8, 128], strides = [1, 1]} : vector<8x512xbf16> to vector<8x128xbf16>
    %114 = math.tanh %113 : vector<8x128xbf16>
    %cst_28 = arith.constant 5.000000e-01 : bf16
    %115 = vector.broadcast %cst_28 : bf16 to vector<8x128xbf16>
    %116 = arith.mulf %115, %114 : vector<8x128xbf16>
    %cst_29 = arith.constant 5.000000e-01 : bf16
    %117 = vector.broadcast %cst_29 : bf16 to vector<8x128xbf16>
    %118 = arith.addf %116, %117 : vector<8x128xbf16>
    %119 = arith.extf %118 : vector<8x128xbf16> to vector<8x128xf32>
    %120 = vector.extract_strided_slice %105 {offsets = [0, 256], sizes = [8, 128], strides = [1, 1]} : vector<8x512xbf16> to vector<8x128xbf16>
    %121 = math.tanh %120 : vector<8x128xbf16>
    %122 = arith.extf %121 : vector<8x128xbf16> to vector<8x128xf32>
    %123 = vector.extract_strided_slice %105 {offsets = [0, 384], sizes = [8, 128], strides = [1, 1]} : vector<8x512xbf16> to vector<8x128xbf16>
    %124 = math.tanh %123 : vector<8x128xbf16>
    %cst_30 = arith.constant 5.000000e-01 : bf16
    %125 = vector.broadcast %cst_30 : bf16 to vector<8x128xbf16>
    %126 = arith.mulf %125, %124 : vector<8x128xbf16>
    %cst_31 = arith.constant 5.000000e-01 : bf16
    %127 = vector.broadcast %cst_31 : bf16 to vector<8x128xbf16>
    %128 = arith.addf %126, %127 : vector<8x128xbf16>
    %129 = arith.extf %128 : vector<8x128xbf16> to vector<8x128xf32>
    %130 = arith.mulf %119, %89 : vector<8x128xf32>
    %131 = arith.mulf %112, %122 : vector<8x128xf32>
    %132 = arith.addf %130, %131 : vector<8x128xf32>
    %133 = arith.truncf %132 : vector<8x128xf32> to vector<8x128xbf16>
    %134 = math.tanh %133 : vector<8x128xbf16>
    %135 = arith.extf %134 : vector<8x128xbf16> to vector<8x128xf32>
    %136 = arith.mulf %129, %135 : vector<8x128xf32>
    %c3_i32 = arith.constant 3 : i32
    %c0_32 = arith.constant 0 : index
    %137 = arith.index_cast %c3_i32 : i32 to index
    %c0_33 = arith.constant 0 : index
    %138 = vector.load %arg1[%c0_32, %137, %c0_33] : memref<1x8x8xf32, #tpu.memory_space<vmem>>, vector<1x1x8xf32>
    %139 = vector.shape_cast %138 : vector<1x1x8xf32> to vector<8xf32>
    %140 = vector.shape_cast %139 : vector<8xf32> to vector<8x1xf32>
    %cst_34 = arith.constant 1.000000e+00 : f32
    %141 = vector.broadcast %cst_34 : f32 to vector<8x128xf32>
    %142 = arith.select %5, %141, %136 : vector<8x128xi1>, vector<8x128xf32>
    %143 = vector.shape_cast %140 : vector<8x1xf32> to vector<8x1xf32>
    %144 = vector.broadcast %143 : vector<8x1xf32> to vector<8x128xf32>
    %145 = arith.select %3, %144, %142 : vector<8x128xi1>, vector<8x128xf32>
    %146 = arith.truncf %145 : vector<8x128xf32> to vector<8x128xbf16>
    %cst_35 = arith.constant dense<0.000000e+00> : vector<8x512xf32>
    %147 = tpu.matmul %146, %0, %cst_35 {dimension_numbers = #tpu.dot_dimension_numbers<[1], [0], [0], [1], [0, 0, 1, 1], [], []>} : vector<8x128xbf16>, vector<128x512xbf16>, vector<8x512xf32> -> vector<8x512xf32>
    %148 = arith.truncf %147 : vector<8x512xf32> to vector<8x512xbf16>
    %149 = vector.extract_strided_slice %148 {offsets = [0, 0], sizes = [8, 128], strides = [1, 1]} : vector<8x512xbf16> to vector<8x128xbf16>
    %150 = math.tanh %149 : vector<8x128xbf16>
    %cst_36 = arith.constant 5.000000e-01 : bf16
    %151 = vector.broadcast %cst_36 : bf16 to vector<8x128xbf16>
    %152 = arith.mulf %151, %150 : vector<8x128xbf16>
    %cst_37 = arith.constant 5.000000e-01 : bf16
    %153 = vector.broadcast %cst_37 : bf16 to vector<8x128xbf16>
    %154 = arith.addf %152, %153 : vector<8x128xbf16>
    %155 = arith.extf %154 : vector<8x128xbf16> to vector<8x128xf32>
    %156 = vector.extract_strided_slice %148 {offsets = [0, 128], sizes = [8, 128], strides = [1, 1]} : vector<8x512xbf16> to vector<8x128xbf16>
    %157 = math.tanh %156 : vector<8x128xbf16>
    %cst_38 = arith.constant 5.000000e-01 : bf16
    %158 = vector.broadcast %cst_38 : bf16 to vector<8x128xbf16>
    %159 = arith.mulf %158, %157 : vector<8x128xbf16>
    %cst_39 = arith.constant 5.000000e-01 : bf16
    %160 = vector.broadcast %cst_39 : bf16 to vector<8x128xbf16>
    %161 = arith.addf %159, %160 : vector<8x128xbf16>
    %162 = arith.extf %161 : vector<8x128xbf16> to vector<8x128xf32>
    %163 = vector.extract_strided_slice %148 {offsets = [0, 256], sizes = [8, 128], strides = [1, 1]} : vector<8x512xbf16> to vector<8x128xbf16>
    %164 = math.tanh %163 : vector<8x128xbf16>
    %165 = arith.extf %164 : vector<8x128xbf16> to vector<8x128xf32>
    %166 = vector.extract_strided_slice %148 {offsets = [0, 384], sizes = [8, 128], strides = [1, 1]} : vector<8x512xbf16> to vector<8x128xbf16>
    %167 = math.tanh %166 : vector<8x128xbf16>
    %cst_40 = arith.constant 5.000000e-01 : bf16
    %168 = vector.broadcast %cst_40 : bf16 to vector<8x128xbf16>
    %169 = arith.mulf %168, %167 : vector<8x128xbf16>
    %cst_41 = arith.constant 5.000000e-01 : bf16
    %170 = vector.broadcast %cst_41 : bf16 to vector<8x128xbf16>
    %171 = arith.addf %169, %170 : vector<8x128xbf16>
    %172 = arith.extf %171 : vector<8x128xbf16> to vector<8x128xf32>
    %173 = arith.mulf %162, %132 : vector<8x128xf32>
    %174 = arith.mulf %155, %165 : vector<8x128xf32>
    %175 = arith.addf %173, %174 : vector<8x128xf32>
    %176 = arith.truncf %175 : vector<8x128xf32> to vector<8x128xbf16>
    %177 = math.tanh %176 : vector<8x128xbf16>
    %178 = arith.extf %177 : vector<8x128xbf16> to vector<8x128xf32>
    %179 = arith.mulf %172, %178 : vector<8x128xf32>
    %c4_i32 = arith.constant 4 : i32
    %c0_42 = arith.constant 0 : index
    %180 = arith.index_cast %c4_i32 : i32 to index
    %c0_43 = arith.constant 0 : index
    %181 = vector.load %arg1[%c0_42, %180, %c0_43] : memref<1x8x8xf32, #tpu.memory_space<vmem>>, vector<1x1x8xf32>
    %182 = vector.shape_cast %181 : vector<1x1x8xf32> to vector<8xf32>
    %183 = vector.shape_cast %182 : vector<8xf32> to vector<8x1xf32>
    %cst_44 = arith.constant 1.000000e+00 : f32
    %184 = vector.broadcast %cst_44 : f32 to vector<8x128xf32>
    %185 = arith.select %5, %184, %179 : vector<8x128xi1>, vector<8x128xf32>
    %186 = vector.shape_cast %183 : vector<8x1xf32> to vector<8x1xf32>
    %187 = vector.broadcast %186 : vector<8x1xf32> to vector<8x128xf32>
    %188 = arith.select %3, %187, %185 : vector<8x128xi1>, vector<8x128xf32>
    %189 = arith.truncf %188 : vector<8x128xf32> to vector<8x128xbf16>
    %cst_45 = arith.constant dense<0.000000e+00> : vector<8x512xf32>
    %190 = tpu.matmul %189, %0, %cst_45 {dimension_numbers = #tpu.dot_dimension_numbers<[1], [0], [0], [1], [0, 0, 1, 1], [], []>} : vector<8x128xbf16>, vector<128x512xbf16>, vector<8x512xf32> -> vector<8x512xf32>
    %191 = arith.truncf %190 : vector<8x512xf32> to vector<8x512xbf16>
    %192 = vector.extract_strided_slice %191 {offsets = [0, 0], sizes = [8, 128], strides = [1, 1]} : vector<8x512xbf16> to vector<8x128xbf16>
    %193 = math.tanh %192 : vector<8x128xbf16>
    %cst_46 = arith.constant 5.000000e-01 : bf16
    %194 = vector.broadcast %cst_46 : bf16 to vector<8x128xbf16>
    %195 = arith.mulf %194, %193 : vector<8x128xbf16>
    %cst_47 = arith.constant 5.000000e-01 : bf16
    %196 = vector.broadcast %cst_47 : bf16 to vector<8x128xbf16>
    %197 = arith.addf %195, %196 : vector<8x128xbf16>
    %198 = arith.extf %197 : vector<8x128xbf16> to vector<8x128xf32>
    %199 = vector.extract_strided_slice %191 {offsets = [0, 128], sizes = [8, 128], strides = [1, 1]} : vector<8x512xbf16> to vector<8x128xbf16>
    %200 = math.tanh %199 : vector<8x128xbf16>
    %cst_48 = arith.constant 5.000000e-01 : bf16
    %201 = vector.broadcast %cst_48 : bf16 to vector<8x128xbf16>
    %202 = arith.mulf %201, %200 : vector<8x128xbf16>
    %cst_49 = arith.constant 5.000000e-01 : bf16
    %203 = vector.broadcast %cst_49 : bf16 to vector<8x128xbf16>
    %204 = arith.addf %202, %203 : vector<8x128xbf16>
    %205 = arith.extf %204 : vector<8x128xbf16> to vector<8x128xf32>
    %206 = vector.extract_strided_slice %191 {offsets = [0, 256], sizes = [8, 128], strides = [1, 1]} : vector<8x512xbf16> to vector<8x128xbf16>
    %207 = math.tanh %206 : vector<8x128xbf16>
    %208 = arith.extf %207 : vector<8x128xbf16> to vector<8x128xf32>
    %209 = vector.extract_strided_slice %191 {offsets = [0, 384], sizes = [8, 128], strides = [1, 1]} : vector<8x512xbf16> to vector<8x128xbf16>
    %210 = math.tanh %209 : vector<8x128xbf16>
    %cst_50 = arith.constant 5.000000e-01 : bf16
    %211 = vector.broadcast %cst_50 : bf16 to vector<8x128xbf16>
    %212 = arith.mulf %211, %210 : vector<8x128xbf16>
    %cst_51 = arith.constant 5.000000e-01 : bf16
    %213 = vector.broadcast %cst_51 : bf16 to vector<8x128xbf16>
    %214 = arith.addf %212, %213 : vector<8x128xbf16>
    %215 = arith.extf %214 : vector<8x128xbf16> to vector<8x128xf32>
    %216 = arith.mulf %205, %175 : vector<8x128xf32>
    %217 = arith.mulf %198, %208 : vector<8x128xf32>
    %218 = arith.addf %216, %217 : vector<8x128xf32>
    %219 = arith.truncf %218 : vector<8x128xf32> to vector<8x128xbf16>
    %220 = math.tanh %219 : vector<8x128xbf16>
    %221 = arith.extf %220 : vector<8x128xbf16> to vector<8x128xf32>
    %222 = arith.mulf %215, %221 : vector<8x128xf32>
    %c5_i32 = arith.constant 5 : i32
    %c0_52 = arith.constant 0 : index
    %223 = arith.index_cast %c5_i32 : i32 to index
    %c0_53 = arith.constant 0 : index
    %224 = vector.load %arg1[%c0_52, %223, %c0_53] : memref<1x8x8xf32, #tpu.memory_space<vmem>>, vector<1x1x8xf32>
    %225 = vector.shape_cast %224 : vector<1x1x8xf32> to vector<8xf32>
    %226 = vector.shape_cast %225 : vector<8xf32> to vector<8x1xf32>
    %cst_54 = arith.constant 1.000000e+00 : f32
    %227 = vector.broadcast %cst_54 : f32 to vector<8x128xf32>
    %228 = arith.select %5, %227, %222 : vector<8x128xi1>, vector<8x128xf32>
    %229 = vector.shape_cast %226 : vector<8x1xf32> to vector<8x1xf32>
    %230 = vector.broadcast %229 : vector<8x1xf32> to vector<8x128xf32>
    %231 = arith.select %3, %230, %228 : vector<8x128xi1>, vector<8x128xf32>
    %232 = arith.truncf %231 : vector<8x128xf32> to vector<8x128xbf16>
    %cst_55 = arith.constant dense<0.000000e+00> : vector<8x512xf32>
    %233 = tpu.matmul %232, %0, %cst_55 {dimension_numbers = #tpu.dot_dimension_numbers<[1], [0], [0], [1], [0, 0, 1, 1], [], []>} : vector<8x128xbf16>, vector<128x512xbf16>, vector<8x512xf32> -> vector<8x512xf32>
    %234 = arith.truncf %233 : vector<8x512xf32> to vector<8x512xbf16>
    %235 = vector.extract_strided_slice %234 {offsets = [0, 0], sizes = [8, 128], strides = [1, 1]} : vector<8x512xbf16> to vector<8x128xbf16>
    %236 = math.tanh %235 : vector<8x128xbf16>
    %cst_56 = arith.constant 5.000000e-01 : bf16
    %237 = vector.broadcast %cst_56 : bf16 to vector<8x128xbf16>
    %238 = arith.mulf %237, %236 : vector<8x128xbf16>
    %cst_57 = arith.constant 5.000000e-01 : bf16
    %239 = vector.broadcast %cst_57 : bf16 to vector<8x128xbf16>
    %240 = arith.addf %238, %239 : vector<8x128xbf16>
    %241 = arith.extf %240 : vector<8x128xbf16> to vector<8x128xf32>
    %242 = vector.extract_strided_slice %234 {offsets = [0, 128], sizes = [8, 128], strides = [1, 1]} : vector<8x512xbf16> to vector<8x128xbf16>
    %243 = math.tanh %242 : vector<8x128xbf16>
    %cst_58 = arith.constant 5.000000e-01 : bf16
    %244 = vector.broadcast %cst_58 : bf16 to vector<8x128xbf16>
    %245 = arith.mulf %244, %243 : vector<8x128xbf16>
    %cst_59 = arith.constant 5.000000e-01 : bf16
    %246 = vector.broadcast %cst_59 : bf16 to vector<8x128xbf16>
    %247 = arith.addf %245, %246 : vector<8x128xbf16>
    %248 = arith.extf %247 : vector<8x128xbf16> to vector<8x128xf32>
    %249 = vector.extract_strided_slice %234 {offsets = [0, 256], sizes = [8, 128], strides = [1, 1]} : vector<8x512xbf16> to vector<8x128xbf16>
    %250 = math.tanh %249 : vector<8x128xbf16>
    %251 = arith.extf %250 : vector<8x128xbf16> to vector<8x128xf32>
    %252 = vector.extract_strided_slice %234 {offsets = [0, 384], sizes = [8, 128], strides = [1, 1]} : vector<8x512xbf16> to vector<8x128xbf16>
    %253 = math.tanh %252 : vector<8x128xbf16>
    %cst_60 = arith.constant 5.000000e-01 : bf16
    %254 = vector.broadcast %cst_60 : bf16 to vector<8x128xbf16>
    %255 = arith.mulf %254, %253 : vector<8x128xbf16>
    %cst_61 = arith.constant 5.000000e-01 : bf16
    %256 = vector.broadcast %cst_61 : bf16 to vector<8x128xbf16>
    %257 = arith.addf %255, %256 : vector<8x128xbf16>
    %258 = arith.extf %257 : vector<8x128xbf16> to vector<8x128xf32>
    %259 = arith.mulf %248, %218 : vector<8x128xf32>
    %260 = arith.mulf %241, %251 : vector<8x128xf32>
    %261 = arith.addf %259, %260 : vector<8x128xf32>
    %262 = arith.truncf %261 : vector<8x128xf32> to vector<8x128xbf16>
    %263 = math.tanh %262 : vector<8x128xbf16>
    %264 = arith.extf %263 : vector<8x128xbf16> to vector<8x128xf32>
    %265 = arith.mulf %258, %264 : vector<8x128xf32>
    %c6_i32 = arith.constant 6 : i32
    %c0_62 = arith.constant 0 : index
    %266 = arith.index_cast %c6_i32 : i32 to index
    %c0_63 = arith.constant 0 : index
    %267 = vector.load %arg1[%c0_62, %266, %c0_63] : memref<1x8x8xf32, #tpu.memory_space<vmem>>, vector<1x1x8xf32>
    %268 = vector.shape_cast %267 : vector<1x1x8xf32> to vector<8xf32>
    %269 = vector.shape_cast %268 : vector<8xf32> to vector<8x1xf32>
    %cst_64 = arith.constant 1.000000e+00 : f32
    %270 = vector.broadcast %cst_64 : f32 to vector<8x128xf32>
    %271 = arith.select %5, %270, %265 : vector<8x128xi1>, vector<8x128xf32>
    %272 = vector.shape_cast %269 : vector<8x1xf32> to vector<8x1xf32>
    %273 = vector.broadcast %272 : vector<8x1xf32> to vector<8x128xf32>
    %274 = arith.select %3, %273, %271 : vector<8x128xi1>, vector<8x128xf32>
    %275 = arith.truncf %274 : vector<8x128xf32> to vector<8x128xbf16>
    %cst_65 = arith.constant dense<0.000000e+00> : vector<8x512xf32>
    %276 = tpu.matmul %275, %0, %cst_65 {dimension_numbers = #tpu.dot_dimension_numbers<[1], [0], [0], [1], [0, 0, 1, 1], [], []>} : vector<8x128xbf16>, vector<128x512xbf16>, vector<8x512xf32> -> vector<8x512xf32>
    %277 = arith.truncf %276 : vector<8x512xf32> to vector<8x512xbf16>
    %278 = vector.extract_strided_slice %277 {offsets = [0, 0], sizes = [8, 128], strides = [1, 1]} : vector<8x512xbf16> to vector<8x128xbf16>
    %279 = math.tanh %278 : vector<8x128xbf16>
    %cst_66 = arith.constant 5.000000e-01 : bf16
    %280 = vector.broadcast %cst_66 : bf16 to vector<8x128xbf16>
    %281 = arith.mulf %280, %279 : vector<8x128xbf16>
    %cst_67 = arith.constant 5.000000e-01 : bf16
    %282 = vector.broadcast %cst_67 : bf16 to vector<8x128xbf16>
    %283 = arith.addf %281, %282 : vector<8x128xbf16>
    %284 = arith.extf %283 : vector<8x128xbf16> to vector<8x128xf32>
    %285 = vector.extract_strided_slice %277 {offsets = [0, 128], sizes = [8, 128], strides = [1, 1]} : vector<8x512xbf16> to vector<8x128xbf16>
    %286 = math.tanh %285 : vector<8x128xbf16>
    %cst_68 = arith.constant 5.000000e-01 : bf16
    %287 = vector.broadcast %cst_68 : bf16 to vector<8x128xbf16>
    %288 = arith.mulf %287, %286 : vector<8x128xbf16>
    %cst_69 = arith.constant 5.000000e-01 : bf16
    %289 = vector.broadcast %cst_69 : bf16 to vector<8x128xbf16>
    %290 = arith.addf %288, %289 : vector<8x128xbf16>
    %291 = arith.extf %290 : vector<8x128xbf16> to vector<8x128xf32>
    %292 = vector.extract_strided_slice %277 {offsets = [0, 256], sizes = [8, 128], strides = [1, 1]} : vector<8x512xbf16> to vector<8x128xbf16>
    %293 = math.tanh %292 : vector<8x128xbf16>
    %294 = arith.extf %293 : vector<8x128xbf16> to vector<8x128xf32>
    %295 = vector.extract_strided_slice %277 {offsets = [0, 384], sizes = [8, 128], strides = [1, 1]} : vector<8x512xbf16> to vector<8x128xbf16>
    %296 = math.tanh %295 : vector<8x128xbf16>
    %cst_70 = arith.constant 5.000000e-01 : bf16
    %297 = vector.broadcast %cst_70 : bf16 to vector<8x128xbf16>
    %298 = arith.mulf %297, %296 : vector<8x128xbf16>
    %cst_71 = arith.constant 5.000000e-01 : bf16
    %299 = vector.broadcast %cst_71 : bf16 to vector<8x128xbf16>
    %300 = arith.addf %298, %299 : vector<8x128xbf16>
    %301 = arith.extf %300 : vector<8x128xbf16> to vector<8x128xf32>
    %302 = arith.mulf %291, %261 : vector<8x128xf32>
    %303 = arith.mulf %284, %294 : vector<8x128xf32>
    %304 = arith.addf %302, %303 : vector<8x128xf32>
    %305 = arith.truncf %304 : vector<8x128xf32> to vector<8x128xbf16>
    %306 = math.tanh %305 : vector<8x128xbf16>
    %307 = arith.extf %306 : vector<8x128xbf16> to vector<8x128xf32>
    %308 = arith.mulf %301, %307 : vector<8x128xf32>
    %c7_i32 = arith.constant 7 : i32
    %c0_72 = arith.constant 0 : index
    %309 = arith.index_cast %c7_i32 : i32 to index
    %c0_73 = arith.constant 0 : index
    %310 = vector.load %arg1[%c0_72, %309, %c0_73] : memref<1x8x8xf32, #tpu.memory_space<vmem>>, vector<1x1x8xf32>
    %311 = vector.shape_cast %310 : vector<1x1x8xf32> to vector<8xf32>
    %312 = vector.shape_cast %311 : vector<8xf32> to vector<8x1xf32>
    %cst_74 = arith.constant 1.000000e+00 : f32
    %313 = vector.broadcast %cst_74 : f32 to vector<8x128xf32>
    %314 = arith.select %5, %313, %308 : vector<8x128xi1>, vector<8x128xf32>
    %315 = vector.shape_cast %312 : vector<8x1xf32> to vector<8x1xf32>
    %316 = vector.broadcast %315 : vector<8x1xf32> to vector<8x128xf32>
    %317 = arith.select %3, %316, %314 : vector<8x128xi1>, vector<8x128xf32>
    %318 = arith.truncf %317 : vector<8x128xf32> to vector<8x128xbf16>
    %cst_75 = arith.constant dense<0.000000e+00> : vector<8x512xf32>
    %319 = tpu.matmul %318, %0, %cst_75 {dimension_numbers = #tpu.dot_dimension_numbers<[1], [0], [0], [1], [0, 0, 1, 1], [], []>} : vector<8x128xbf16>, vector<128x512xbf16>, vector<8x512xf32> -> vector<8x512xf32>
    %320 = arith.truncf %319 : vector<8x512xf32> to vector<8x512xbf16>
    %321 = vector.extract_strided_slice %320 {offsets = [0, 0], sizes = [8, 128], strides = [1, 1]} : vector<8x512xbf16> to vector<8x128xbf16>
    %322 = math.tanh %321 : vector<8x128xbf16>
    %cst_76 = arith.constant 5.000000e-01 : bf16
    %323 = vector.broadcast %cst_76 : bf16 to vector<8x128xbf16>
    %324 = arith.mulf %323, %322 : vector<8x128xbf16>
    %cst_77 = arith.constant 5.000000e-01 : bf16
    %325 = vector.broadcast %cst_77 : bf16 to vector<8x128xbf16>
    %326 = arith.addf %324, %325 : vector<8x128xbf16>
    %327 = arith.extf %326 : vector<8x128xbf16> to vector<8x128xf32>
    %328 = vector.extract_strided_slice %320 {offsets = [0, 128], sizes = [8, 128], strides = [1, 1]} : vector<8x512xbf16> to vector<8x128xbf16>
    %329 = math.tanh %328 : vector<8x128xbf16>
    %cst_78 = arith.constant 5.000000e-01 : bf16
    %330 = vector.broadcast %cst_78 : bf16 to vector<8x128xbf16>
    %331 = arith.mulf %330, %329 : vector<8x128xbf16>
    %cst_79 = arith.constant 5.000000e-01 : bf16
    %332 = vector.broadcast %cst_79 : bf16 to vector<8x128xbf16>
    %333 = arith.addf %331, %332 : vector<8x128xbf16>
    %334 = arith.extf %333 : vector<8x128xbf16> to vector<8x128xf32>
    %335 = vector.extract_strided_slice %320 {offsets = [0, 256], sizes = [8, 128], strides = [1, 1]} : vector<8x512xbf16> to vector<8x128xbf16>
    %336 = math.tanh %335 : vector<8x128xbf16>
    %337 = arith.extf %336 : vector<8x128xbf16> to vector<8x128xf32>
    %338 = vector.extract_strided_slice %320 {offsets = [0, 384], sizes = [8, 128], strides = [1, 1]} : vector<8x512xbf16> to vector<8x128xbf16>
    %339 = math.tanh %338 : vector<8x128xbf16>
    %cst_80 = arith.constant 5.000000e-01 : bf16
    %340 = vector.broadcast %cst_80 : bf16 to vector<8x128xbf16>
    %341 = arith.mulf %340, %339 : vector<8x128xbf16>
    %cst_81 = arith.constant 5.000000e-01 : bf16
    %342 = vector.broadcast %cst_81 : bf16 to vector<8x128xbf16>
    %343 = arith.addf %341, %342 : vector<8x128xbf16>
    %344 = arith.extf %343 : vector<8x128xbf16> to vector<8x128xf32>
    %345 = arith.mulf %334, %304 : vector<8x128xf32>
    %346 = arith.mulf %327, %337 : vector<8x128xf32>
    %347 = arith.addf %345, %346 : vector<8x128xf32>
    %348 = arith.truncf %347 : vector<8x128xf32> to vector<8x128xbf16>
    %349 = math.tanh %348 : vector<8x128xbf16>
    %350 = arith.extf %349 : vector<8x128xbf16> to vector<8x128xf32>
    %351 = arith.mulf %344, %350 : vector<8x128xf32>
    %c8_i32 = arith.constant 8 : i32
    %352 = arith.truncf %351 : vector<8x128xf32> to vector<8x128xbf16>
    %c0_82 = arith.constant 0 : index
    %c0_83 = arith.constant 0 : index
    %353 = vector.load %arg3[%c0_82, %c0_83] : memref<128x128xbf16, #tpu.memory_space<vmem>>, vector<128x128xbf16>
    %cst_84 = arith.constant dense<0.000000e+00> : vector<8x128xf32>
    %354 = tpu.matmul %352, %353, %cst_84 {dimension_numbers = #tpu.dot_dimension_numbers<[1], [0], [0], [1], [0, 0, 1, 1], [], []>} : vector<8x128xbf16>, vector<128x128xbf16>, vector<8x128xf32> -> vector<8x128xf32>
    %c0_85 = arith.constant 0 : index
    %c0_86 = arith.constant 0 : index
    %355 = vector.load %arg4[%c0_85, %c0_86] : memref<1x128xf32, #tpu.memory_space<vmem>>, vector<1x128xf32>
    %356 = vector.broadcast %355 : vector<1x128xf32> to vector<8x128xf32>
    %357 = arith.addf %354, %356 : vector<8x128xf32>
    %c0_87 = arith.constant 0 : index
    %c0_88 = arith.constant 0 : index
    %c0_89 = arith.constant 0 : index
    %358 = vector.load %arg5[%c0_87, %c0_88, %c0_89] : memref<1x8x128xf32, #tpu.memory_space<vmem>>, vector<1x8x128xf32>
    %359 = vector.shape_cast %358 : vector<1x8x128xf32> to vector<8x128xf32>
    %360 = vector.shape_cast %357 : vector<8x128xf32> to vector<1x8x128xf32>
    tpu.vector_store %arg5[%c0_87, %c0_88, %c0_89], %360 {strides = array<i32>} : memref<1x8x128xf32, #tpu.memory_space<vmem>>, vector<1x8x128xf32>,
    return
  }
  func.func @transform_0(%arg0: i32) -> (i32, i32, i32) {
    %c0_i32 = arith.constant 0 : i32
    %c0_i32_0 = arith.constant 0 : i32
    %c0_i32_1 = arith.constant 0 : i32
    return %arg0, %c0_i32, %c0_i32_0 : i32, i32, i32
  }
  func.func @transform_1(%arg0: i32) -> (i32, i32) {
    %c0_i32 = arith.constant 0 : i32
    %c0_i32_0 = arith.constant 0 : i32
    %c0_i32_1 = arith.constant 0 : i32
    return %c0_i32, %c0_i32_0 : i32, i32
  }
  func.func @transform_2(%arg0: i32) -> (i32, i32) {
    %c0_i32 = arith.constant 0 : i32
    %c0_i32_0 = arith.constant 0 : i32
    %c0_i32_1 = arith.constant 0 : i32
    return %c0_i32, %c0_i32_0 : i32, i32
  }
  func.func @transform_3(%arg0: i32) -> (i32, i32) {
    %c0_i32 = arith.constant 0 : i32
    %c0_i32_0 = arith.constant 0 : i32
    %c0_i32_1 = arith.constant 0 : i32
    return %c0_i32, %c0_i32_0 : i32, i32
  }
  func.func @transform_4(%arg0: i32) -> (i32, i32, i32) {
    %c0_i32 = arith.constant 0 : i32
    %c0_i32_0 = arith.constant 0 : i32
    %c0_i32_1 = arith.constant 0 : i32
    return %arg0, %c0_i32, %c0_i32_0 : i32, i32, i32
  }
}

</mosaic_0001>

<llo_original>
// kernel: lstm_net_forward.1
$region0: #{lstm_net_forward.1}
  #allocation0 [shape = 'u32[]', space=smem, size = 0x4, offset = 0x4, fixed_abs, tag = 'smem constant byte address 0x4 - core index']
  #allocation1 [shape = 'u32[144,128]{1,0:T(1,128)}', space=vmem, size = 0x12000, scoped, tag = 'internal scratch']
  %s0 = inlined_call_operand.vmem [shape: f32[1,8,8], index: 0, kind: input, shape index: {}]
  %s1 = inlined_call_operand.vmem [shape: bf16[128,512], index: 1, kind: input, shape index: {}]
  %s2 = inlined_call_operand.vmem [shape: bf16[128,128], index: 2, kind: input, shape index: {}]
  %s3 = inlined_call_operand.vmem [shape: f32[1,128], index: 3, kind: input, shape index: {}]
  %s4 = inlined_call_operand.vmem [shape: f32[1,8,128], index: 4, kind: output, shape index: {}]
  %s5 = sld [smem:[#allocation0]]
  $region26: #{lstm_net_forward.1} parent=0
    _
  %s7 = ssub.s32 1, %s5
  %s8 = scalar_select 0, %s7, %s5
  // Predicated region
  $region2: #{lstm_net_forward.1} parent=0 // pred_check
    _
  $region3: #{lstm_net_forward.1} parent=0 // pred_check_branch
    %10 = sbr.rel (0) target = $region5
  $region4: #{lstm_net_forward.1} parent=0 // pred_region
    _
  $region5: #{lstm_net_forward.1} parent=0 // pred_fallthru
    _
  // Predicated region
  $region6: #{lstm_net_forward.1} parent=0 // pred_check
    _
  $region7: #{lstm_net_forward.1} parent=0 // pred_check_branch
    %12 = sbr.rel (0) target = $region9
  $region8: #{lstm_net_forward.1} parent=0 // pred_region
    _
  $region9: #{lstm_net_forward.1} parent=0 // pred_fallthru
    _
  // Predicated region
  $region10: #{lstm_net_forward.1} parent=0 // pred_check
    _
  $region11: #{lstm_net_forward.1} parent=0 // pred_check_branch
    %14 = sbr.rel (0) target = $region13
  $region12: #{lstm_net_forward.1} parent=0 // pred_region
    _
  $region13: #{lstm_net_forward.1} parent=0 // pred_fallthru
    _
  // Predicated region
  $region14: #{lstm_net_forward.1} parent=0 // pred_check
    _
  $region15: #{lstm_net_forward.1} parent=0 // pred_check_branch
    %16 = sbr.rel (0) target = $region17
  $region16: #{lstm_net_forward.1} parent=0 // pred_region
    _
  $region17: #{lstm_net_forward.1} parent=0 // pred_fallthru
    _
  %v19 = vld [vmem:[%s1] sm:$0xff]
  %v20 = vld [vmem:[%s1 + $0x8] sm:$0xff]
  %v21 = vld [vmem:[%s1 + $0x10] sm:$0xff]
  %v22 = vld [vmem:[%s1 + $0x18] sm:$0xff]
  %v23 = vld [vmem:[%s1 + $0x20] sm:$0xff]
  %v24 = vld [vmem:[%s1 + $0x28] sm:$0xff]
  %v25 = vld [vmem:[%s1 + $0x30] sm:$0xff]
  %v26 = vld [vmem:[%s1 + $0x38] sm:$0xff]
  %v27 = vld [vmem:[%s1 + $0x40] sm:$0xff]
  %v28 = vld [vmem:[%s1 + $0x48] sm:$0xff]
  %v29 = vld [vmem:[%s1 + $0x50] sm:$0xff]
  %v30 = vld [vmem:[%s1 + $0x58] sm:$0xff]
  %v31 = vld [vmem:[%s1 + $0x60] sm:$0xff]
  %v32 = vld [vmem:[%s1 + $0x68] sm:$0xff]
  %v33 = vld [vmem:[%s1 + $0x70] sm:$0xff]
  %v34 = vld [vmem:[%s1 + $0x78] sm:$0xff]
  %v35 = vld [vmem:[%s1 + $0x80] sm:$0xff]
  %v36 = vld [vmem:[%s1 + $0x88] sm:$0xff]
  %v37 = vld [vmem:[%s1 + $0x90] sm:$0xff]
  %v38 = vld [vmem:[%s1 + $0x98] sm:$0xff]
  %v39 = vld [vmem:[%s1 + $0xa0] sm:$0xff]
  %v40 = vld [vmem:[%s1 + $0xa8] sm:$0xff]
  %v41 = vld [vmem:[%s1 + $0xb0] sm:$0xff]
  %v42 = vld [vmem:[%s1 + $0xb8] sm:$0xff]
  %v43 = vld [vmem:[%s1 + $0xc0] sm:$0xff]
  %v44 = vld [vmem:[%s1 + $0xc8] sm:$0xff]
  %v45 = vld [vmem:[%s1 + $0xd0] sm:$0xff]
  %v46 = vld [vmem:[%s1 + $0xd8] sm:$0xff]
  %v47 = vld [vmem:[%s1 + $0xe0] sm:$0xff]
  %v48 = vld [vmem:[%s1 + $0xe8] sm:$0xff]
  %v49 = vld [vmem:[%s1 + $0xf0] sm:$0xff]
  %v50 = vld [vmem:[%s1 + $0xf8] sm:$0xff]
  %v51 = vlaneseq
  %v52 = vand.u32 %v51, 127
  %vm53 = vcmp.eq.s32.totalorder %v52, 50
  %vm54 = vcmp.eq.s32.totalorder %v52, 51
  %v55 = vld [vmem:[%s0] sm:$0x1]
  %v56 = vlaneseq
  %v57 = vshrl.u32 %v56, 7
  %v58 = vsub.s32 0, %v57
  %v59 = vrot.slane %v55, %v58
  %61 = vbcast.lane.b32.xlu0 %v59, 256
  %v62 = vpop.permute.xlu0 %61
  %v63 = vsel %vm54, 1.0, 0.0
  %v64 = vsel %vm53, %v62, %v63
  %v65 = vpack.c.bf16 %v64, %v64
  %v98 = vunpack.c.l.b16 %v19
  %v99 = vunpack.c.h.b16 %v19
  %v100 = vunpack.c.l.b16 %v20
  %v101 = vunpack.c.h.b16 %v20
  %v102 = vunpack.c.l.b16 %v21
  %v103 = vunpack.c.h.b16 %v21
  %v104 = vunpack.c.l.b16 %v22
  %v105 = vunpack.c.h.b16 %v22
  %v106 = vunpack.c.l.b16 %v23
  %v107 = vunpack.c.h.b16 %v23
  %v108 = vunpack.c.l.b16 %v24
  %v109 = vunpack.c.h.b16 %v24
  %v110 = vunpack.c.l.b16 %v25
  %v111 = vunpack.c.h.b16 %v25
  %v112 = vunpack.c.l.b16 %v26
  %v113 = vunpack.c.h.b16 %v26
  %v114 = vunpack.c.l.b16 %v27
  %v115 = vunpack.c.h.b16 %v27
  %v116 = vunpack.c.l.b16 %v28
  %v117 = vunpack.c.h.b16 %v28
  %v118 = vunpack.c.l.b16 %v29
  %v119 = vunpack.c.h.b16 %v29
  %v120 = vunpack.c.l.b16 %v30
  %v121 = vunpack.c.h.b16 %v30
  %v122 = vunpack.c.l.b16 %v31
  %v123 = vunpack.c.h.b16 %v31
  %v124 = vunpack.c.l.b16 %v32
  %v125 = vunpack.c.h.b16 %v32
  %v126 = vunpack.c.l.b16 %v33
  %v127 = vunpack.c.h.b16 %v33
  %v128 = vunpack.c.l.b16 %v34
  %v129 = vunpack.c.h.b16 %v34
  %v130 = vunpack.c.l.b16 %v35
  %v131 = vunpack.c.h.b16 %v35
  %v132 = vunpack.c.l.b16 %v36
  %v133 = vunpack.c.h.b16 %v36
  %v134 = vunpack.c.l.b16 %v37
  %v135 = vunpack.c.h.b16 %v37
  %v136 = vunpack.c.l.b16 %v38
  %v137 = vunpack.c.h.b16 %v38
  %v138 = vunpack.c.l.b16 %v39
  %v139 = vunpack.c.h.b16 %v39
  %v140 = vunpack.c.l.b16 %v40
  %v141 = vunpack.c.h.b16 %v40
  %v142 = vunpack.c.l.b16 %v41
  %v143 = vunpack.c.h.b16 %v41
  %v144 = vunpack.c.l.b16 %v42
  %v145 = vunpack.c.h.b16 %v42
  %v146 = vunpack.c.l.b16 %v43
  %v147 = vunpack.c.h.b16 %v43
  %v148 = vunpack.c.l.b16 %v44
  %v149 = vunpack.c.h.b16 %v44
  %v150 = vunpack.c.l.b16 %v45
  %v151 = vunpack.c.h.b16 %v45
  %v152 = vunpack.c.l.b16 %v46
  %v153 = vunpack.c.h.b16 %v46
  %v154 = vunpack.c.l.b16 %v47
  %v155 = vunpack.c.h.b16 %v47
  %v156 = vunpack.c.l.b16 %v48
  %v157 = vunpack.c.h.b16 %v48
  %v158 = vunpack.c.l.b16 %v49
  %v159 = vunpack.c.h.b16 %v49
  %v160 = vunpack.c.l.b16 %v50
  %v161 = vunpack.c.h.b16 %v50
  %v162 = vpack.c.b16 %v102, %v98
  %v163 = vpack.c.b16 %v103, %v99
  %v164 = vpack.c.b16 %v104, %v100
  %v165 = vpack.c.b16 %v105, %v101
  %v166 = vpack.c.b16 %v110, %v106
  %v167 = vpack.c.b16 %v111, %v107
  %v168 = vpack.c.b16 %v112, %v108
  %v169 = vpack.c.b16 %v113, %v109
  %v170 = vpack.c.b16 %v118, %v114
  %v171 = vpack.c.b16 %v119, %v115
  %v172 = vpack.c.b16 %v120, %v116
  %v173 = vpack.c.b16 %v121, %v117
  %v174 = vpack.c.b16 %v126, %v122
  %v175 = vpack.c.b16 %v127, %v123
  %v176 = vpack.c.b16 %v128, %v124
  %v177 = vpack.c.b16 %v129, %v125
  %v178 = vpack.c.b16 %v134, %v130
  %v179 = vpack.c.b16 %v135, %v131
  %v180 = vpack.c.b16 %v136, %v132
  %v181 = vpack.c.b16 %v137, %v133
  %v182 = vpack.c.b16 %v142, %v138
  %v183 = vpack.c.b16 %v143, %v139
  %v184 = vpack.c.b16 %v144, %v140
  %v185 = vpack.c.b16 %v145, %v141
  %v186 = vpack.c.b16 %v150, %v146
  %v187 = vpack.c.b16 %v151, %v147
  %v188 = vpack.c.b16 %v152, %v148
  %v189 = vpack.c.b16 %v153, %v149
  %v190 = vpack.c.b16 %v158, %v154
  %v191 = vpack.c.b16 %v159, %v155
  %v192 = vpack.c.b16 %v160, %v156
  %v193 = vpack.c.b16 %v161, %v157
  %226 = vmatprep.subr.bf16.mxu0 %v191
  %227 = vmatpush1.bf16.msra.mxu0 %v190
  %228 = vmatprep.subr.bf16.mxu0 %v187
  %229 = vmatpush1.bf16.msra.mxu0 %v186
  %230 = vmatprep.subr.bf16.mxu0 %v183
  %231 = vmatpush1.bf16.msra.mxu0 %v182
  %232 = vmatprep.subr.bf16.mxu0 %v179
  %233 = vmatpush1.bf16.msra.mxu0 %v178
  %234 = vmatprep.subr.bf16.mxu0 %v175
  %235 = vmatpush1.bf16.msra.mxu0 %v174
  %236 = vmatprep.subr.bf16.mxu0 %v171
  %237 = vmatpush1.bf16.msra.mxu0 %v170
  %238 = vmatprep.subr.bf16.mxu0 %v167
  %239 = vmatpush1.bf16.msra.mxu0 %v166
  %240 = vmatprep.subr.bf16.mxu0 %v163
  %241 = vmatpush1.bf16.msra.mxu0 %v162
  %242 = vmatprep.subr.bf16.mxu0 0
  %243 = vmatpush2.bf16.msra.mxu0 0
  %244 = vmatprep.subr.bf16.mxu0 0
  %245 = vmatpush2.bf16.msra.mxu0 0
  %246 = vmatprep.subr.bf16.mxu0 0
  %247 = vmatpush2.bf16.msra.mxu0 0
  %248 = vmatprep.subr.bf16.mxu0 0
  %249 = vmatpush2.bf16.msra.mxu0 0
  %250 = vmatprep.subr.bf16.mxu0 0
  %251 = vmatpush2.bf16.msra.mxu0 0
  %252 = vmatprep.subr.bf16.mxu0 0
  %253 = vmatpush2.bf16.msra.mxu0 0
  %254 = vmatprep.subr.bf16.mxu0 0
  %255 = vmatpush2.bf16.msra.mxu0 0
  %256 = vmatprep.subr.bf16.mxu0 0
  %257 = vmatpush2.bf16.msra.mxu0 0
  %258 = vmatprep.mubr.bf16.mxu0 0
  %259 = vmatmul.mubr.bf16.gmra.mxu0 %v65
  %v260 = vpop.f32.mrf.mxu0
  %v261 = vadd.f32 0.0, %v260
  %v262 = vpop.f32.mrf.mxu0
  %v263 = vadd.f32 0.0, %v262
  %v264 = vpop.f32.mrf.mxu0
  %v265 = vpop.f32.mrf.mxu0
  %266 = vdwg.mxu0
  %267 = vmatprep.subr.bf16.mxu0 %v193
  %268 = vmatpush1.bf16.msra.mxu0 %v192
  %269 = vmatprep.subr.bf16.mxu0 %v189
  %270 = vmatpush1.bf16.msra.mxu0 %v188
  %271 = vmatprep.subr.bf16.mxu0 %v185
  %272 = vmatpush1.bf16.msra.mxu0 %v184
  %273 = vmatprep.subr.bf16.mxu0 %v181
  %274 = vmatpush1.bf16.msra.mxu0 %v180
  %275 = vmatprep.subr.bf16.mxu0 %v177
  %276 = vmatpush1.bf16.msra.mxu0 %v176
  %277 = vmatprep.subr.bf16.mxu0 %v173
  %278 = vmatpush1.bf16.msra.mxu0 %v172
  %279 = vmatprep.subr.bf16.mxu0 %v169
  %280 = vmatpush1.bf16.msra.mxu0 %v168
  %281 = vmatprep.subr.bf16.mxu0 %v165
  %282 = vmatpush1.bf16.msra.mxu0 %v164
  %283 = vmatprep.subr.bf16.mxu0 0
  %284 = vmatpush2.bf16.msra.mxu0 0
  %285 = vmatprep.subr.bf16.mxu0 0
  %286 = vmatpush2.bf16.msra.mxu0 0
  %287 = vmatprep.subr.bf16.mxu0 0
  %288 = vmatpush2.bf16.msra.mxu0 0
  %289 = vmatprep.subr.bf16.mxu0 0
  %290 = vmatpush2.bf16.msra.mxu0 0
  %291 = vmatprep.subr.bf16.mxu0 0
  %292 = vmatpush2.bf16.msra.mxu0 0
  %293 = vmatprep.subr.bf16.mxu0 0
  %294 = vmatpush2.bf16.msra.mxu0 0
  %295 = vmatprep.subr.bf16.mxu0 0
  %296 = vmatpush2.bf16.msra.mxu0 0
  %297 = vmatprep.subr.bf16.mxu0 0
  %298 = vmatpush2.bf16.msra.mxu0 0
  %299 = vmatprep.mubr.bf16.mxu0 0
  %300 = vmatmul.mubr.bf16.gmra.mxu0 %v65
  %v301 = vpop.f32.mrf.mxu0
  %v302 = vadd.f32 0.0, %v301
  %v303 = vpop.f32.mrf.mxu0
  %v304 = vadd.f32 0.0, %v303
  %v305 = vpop.f32.mrf.mxu0
  %v306 = vpop.f32.mrf.mxu0
  %307 = vdwg.mxu0
  %v308 = vpack.c.bf16 %v261, %v261
  %v309 = vpack.c.bf16 %v263, %v263
  %v310 = vpack.c.bf16 %v302, %v302
  %v311 = vpack.c.bf16 %v304, %v304
  %v312 = vtanh.bf16.pop %v308
  %v313 = vmul.bf16 %v312, 1056980736
  %v314 = vadd.bf16 %v313, 1056980736
  %v315 = vunpack.c.l.bf16 %v314
  %v316 = vtanh.bf16.pop %v309
  %v317 = vmul.bf16 %v316, 1056980736
  %v318 = vadd.bf16 %v317, 1056980736
  %v319 = vunpack.c.l.bf16 %v318
  %v320 = vtanh.bf16.pop %v310
  %v321 = vunpack.c.l.bf16 %v320
  %v322 = vtanh.bf16.pop %v311
  %v323 = vmul.bf16 %v322, 1056980736
  %v324 = vadd.bf16 %v323, 1056980736
  %v325 = vunpack.c.l.bf16 %v324
  %v326 = vmul.f32 %v319, 0.0
  %v327 = vmul.f32 %v315, %v321
  %v328 = vadd.f32 %v326, %v327
  %v329 = vpack.c.bf16 %v328, %v328
  %v330 = vtanh.bf16.pop %v329
  %v331 = vunpack.c.l.bf16 %v330
  %v332 = vmul.f32 %v325, %v331
  %v333 = vld [vmem:[%s0 + $0x1] sm:$0x1]
  %v334 = vlaneseq
  %v335 = vshrl.u32 %v334, 7
  %v336 = vsub.s32 0, %v335
  %v337 = vrot.slane %v333, %v336
  %339 = vbcast.lane.b32.xlu0 %v337, 256
  %v340 = vpop.permute.xlu0 %339
  %v341 = vsel %vm54, 1.0, %v332
  %v342 = vsel %vm53, %v340, %v341
  %v343 = vpack.c.bf16 %v342, %v342
  %344 = vmatprep.subr.bf16.mxu0 %v191
  %345 = vmatpush1.bf16.msra.mxu0 %v190
  %346 = vmatprep.subr.bf16.mxu0 %v187
  %347 = vmatpush1.bf16.msra.mxu0 %v186
  %348 = vmatprep.subr.bf16.mxu0 %v183
  %349 = vmatpush1.bf16.msra.mxu0 %v182
  %350 = vmatprep.subr.bf16.mxu0 %v179
  %351 = vmatpush1.bf16.msra.mxu0 %v178
  %352 = vmatprep.subr.bf16.mxu0 %v175
  %353 = vmatpush1.bf16.msra.mxu0 %v174
  %354 = vmatprep.subr.bf16.mxu0 %v171
  %355 = vmatpush1.bf16.msra.mxu0 %v170
  %356 = vmatprep.subr.bf16.mxu0 %v167
  %357 = vmatpush1.bf16.msra.mxu0 %v166
  %358 = vmatprep.subr.bf16.mxu0 %v163
  %359 = vmatpush1.bf16.msra.mxu0 %v162
  %360 = vmatprep.subr.bf16.mxu0 0
  %361 = vmatpush2.bf16.msra.mxu0 0
  %362 = vmatprep.subr.bf16.mxu0 0
  %363 = vmatpush2.bf16.msra.mxu0 0
  %364 = vmatprep.subr.bf16.mxu0 0
  %365 = vmatpush2.bf16.msra.mxu0 0
  %366 = vmatprep.subr.bf16.mxu0 0
  %367 = vmatpush2.bf16.msra.mxu0 0
  %368 = vmatprep.subr.bf16.mxu0 0
  %369 = vmatpush2.bf16.msra.mxu0 0
  %370 = vmatprep.subr.bf16.mxu0 0
  %371 = vmatpush2.bf16.msra.mxu0 0
  %372 = vmatprep.subr.bf16.mxu0 0
  %373 = vmatpush2.bf16.msra.mxu0 0
  %374 = vmatprep.subr.bf16.mxu0 0
  %375 = vmatpush2.bf16.msra.mxu0 0
  %376 = vmatprep.mubr.bf16.mxu0 0
  %377 = vmatmul.mubr.bf16.gmra.mxu0 %v343
  %v378 = vpop.f32.mrf.mxu0
  %v379 = vadd.f32 0.0, %v378
  %v380 = vpop.f32.mrf.mxu0
  %v381 = vadd.f32 0.0, %v380
  %v382 = vpop.f32.mrf.mxu0
  %v383 = vpop.f32.mrf.mxu0
  %384 = vdwg.mxu0
  %385 = vmatprep.subr.bf16.mxu0 %v193
  %386 = vmatpush1.bf16.msra.mxu0 %v192
  %387 = vmatprep.subr.bf16.mxu0 %v189
  %388 = vmatpush1.bf16.msra.mxu0 %v188
  %389 = vmatprep.subr.bf16.mxu0 %v185
  %390 = vmatpush1.bf16.msra.mxu0 %v184
  %391 = vmatprep.subr.bf16.mxu0 %v181
  %392 = vmatpush1.bf16.msra.mxu0 %v180
  %393 = vmatprep.subr.bf16.mxu0 %v177
  %394 = vmatpush1.bf16.msra.mxu0 %v176
  %395 = vmatprep.subr.bf16.mxu0 %v173
  %396 = vmatpush1.bf16.msra.mxu0 %v172
  %397 = vmatprep.subr.bf16.mxu0 %v169
  %398 = vmatpush1.bf16.msra.mxu0 %v168
  %399 = vmatprep.subr.bf16.mxu0 %v165
  %400 = vmatpush1.bf16.msra.mxu0 %v164
  %401 = vmatprep.subr.bf16.mxu0 0
  %402 = vmatpush2.bf16.msra.mxu0 0
  %403 = vmatprep.subr.bf16.mxu0 0
  %404 = vmatpush2.bf16.msra.mxu0 0
  %405 = vmatprep.subr.bf16.mxu0 0
  %406 = vmatpush2.bf16.msra.mxu0 0
  %407 = vmatprep.subr.bf16.mxu0 0
  %408 = vmatpush2.bf16.msra.mxu0 0
  %409 = vmatprep.subr.bf16.mxu0 0
  %410 = vmatpush2.bf16.msra.mxu0 0
  %411 = vmatprep.subr.bf16.mxu0 0
  %412 = vmatpush2.bf16.msra.mxu0 0
  %413 = vmatprep.subr.bf16.mxu0 0
  %414 = vmatpush2.bf16.msra.mxu0 0
  %415 = vmatprep.subr.bf16.mxu0 0
  %416 = vmatpush2.bf16.msra.mxu0 0
  %417 = vmatprep.mubr.bf16.mxu0 0
  %418 = vmatmul.mubr.bf16.gmra.mxu0 %v343
  %v419 = vpop.f32.mrf.mxu0
  %v420 = vadd.f32 0.0, %v419
  %v421 = vpop.f32.mrf.mxu0
  %v422 = vadd.f32 0.0, %v421
  %v423 = vpop.f32.mrf.mxu0
  %v424 = vpop.f32.mrf.mxu0
  %425 = vdwg.mxu0
  %v426 = vpack.c.bf16 %v379, %v379
  %v427 = vpack.c.bf16 %v381, %v381
  %v428 = vpack.c.bf16 %v420, %v420
  %v429 = vpack.c.bf16 %v422, %v422
  %v430 = vtanh.bf16.pop %v426
  %v431 = vmul.bf16 %v430, 1056980736
  %v432 = vadd.bf16 %v431, 1056980736
  %v433 = vunpack.c.l.bf16 %v432
  %v434 = vtanh.bf16.pop %v427
  %v435 = vmul.bf16 %v434, 1056980736
  %v436 = vadd.bf16 %v435, 1056980736
  %v437 = vunpack.c.l.bf16 %v436
  %v438 = vtanh.bf16.pop %v428
  %v439 = vunpack.c.l.bf16 %v438
  %v440 = vtanh.bf16.pop %v429
  %v441 = vmul.bf16 %v440, 1056980736
  %v442 = vadd.bf16 %v441, 1056980736
  %v443 = vunpack.c.l.bf16 %v442
  %v444 = vmul.f32 %v437, %v328
  %v445 = vmul.f32 %v433, %v439
  %v446 = vadd.f32 %v444, %v445
  %v447 = vpack.c.bf16 %v446, %v446
  %v448 = vtanh.bf16.pop %v447
  %v449 = vunpack.c.l.bf16 %v448
  %v450 = vmul.f32 %v443, %v449
  %v451 = vld [vmem:[%s0 + $0x2] sm:$0x1]
  %v452 = vlaneseq
  %v453 = vshrl.u32 %v452, 7
  %v454 = vsub.s32 0, %v453
  %v455 = vrot.slane %v451, %v454
  %457 = vbcast.lane.b32.xlu0 %v455, 256
  %v458 = vpop.permute.xlu0 %457
  %v459 = vsel %vm54, 1.0, %v450
  %v460 = vsel %vm53, %v458, %v459
  %v461 = vpack.c.bf16 %v460, %v460
  %462 = vmatprep.subr.bf16.mxu0 %v191
  %463 = vmatpush1.bf16.msra.mxu0 %v190
  %464 = vmatprep.subr.bf16.mxu0 %v187
  %465 = vmatpush1.bf16.msra.mxu0 %v186
  %466 = vmatprep.subr.bf16.mxu0 %v183
  %467 = vmatpush1.bf16.msra.mxu0 %v182
  %468 = vmatprep.subr.bf16.mxu0 %v179
  %469 = vmatpush1.bf16.msra.mxu0 %v178
  %470 = vmatprep.subr.bf16.mxu0 %v175
  %471 = vmatpush1.bf16.msra.mxu0 %v174
  %472 = vmatprep.subr.bf16.mxu0 %v171
  %473 = vmatpush1.bf16.msra.mxu0 %v170
  %474 = vmatprep.subr.bf16.mxu0 %v167
  %475 = vmatpush1.bf16.msra.mxu0 %v166
  %476 = vmatprep.subr.bf16.mxu0 %v163
  %477 = vmatpush1.bf16.msra.mxu0 %v162
  %478 = vmatprep.subr.bf16.mxu0 0
  %479 = vmatpush2.bf16.msra.mxu0 0
  %480 = vmatprep.subr.bf16.mxu0 0
  %481 = vmatpush2.bf16.msra.mxu0 0
  %482 = vmatprep.subr.bf16.mxu0 0
  %483 = vmatpush2.bf16.msra.mxu0 0
  %484 = vmatprep.subr.bf16.mxu0 0
  %485 = vmatpush2.bf16.msra.mxu0 0
  %486 = vmatprep.subr.bf16.mxu0 0
  %487 = vmatpush2.bf16.msra.mxu0 0
  %488 = vmatprep.subr.bf16.mxu0 0
  %489 = vmatpush2.bf16.msra.mxu0 0
  %490 = vmatprep.subr.bf16.mxu0 0
  %491 = vmatpush2.bf16.msra.mxu0 0
  %492 = vmatprep.subr.bf16.mxu0 0
  %493 = vmatpush2.bf16.msra.mxu0 0
  %494 = vmatprep.mubr.bf16.mxu0 0
  %495 = vmatmul.mubr.bf16.gmra.mxu0 %v461
  %v496 = vpop.f32.mrf.mxu0
  %v497 = vadd.f32 0.0, %v496
  %v498 = vpop.f32.mrf.mxu0
  %v499 = vadd.f32 0.0, %v498
  %v500 = vpop.f32.mrf.mxu0
  %v501 = vpop.f32.mrf.mxu0
  %502 = vdwg.mxu0
  %503 = vmatprep.subr.bf16.mxu0 %v193
  %504 = vmatpush1.bf16.msra.mxu0 %v192
  %505 = vmatprep.subr.bf16.mxu0 %v189
  %506 = vmatpush1.bf16.msra.mxu0 %v188
  %507 = vmatprep.subr.bf16.mxu0 %v185
  %508 = vmatpush1.bf16.msra.mxu0 %v184
  %509 = vmatprep.subr.bf16.mxu0 %v181
  %510 = vmatpush1.bf16.msra.mxu0 %v180
  %511 = vmatprep.subr.bf16.mxu0 %v177
  %512 = vmatpush1.bf16.msra.mxu0 %v176
  %513 = vmatprep.subr.bf16.mxu0 %v173
  %514 = vmatpush1.bf16.msra.mxu0 %v172
  %515 = vmatprep.subr.bf16.mxu0 %v169
  %516 = vmatpush1.bf16.msra.mxu0 %v168
  %517 = vmatprep.subr.bf16.mxu0 %v165
  %518 = vmatpush1.bf16.msra.mxu0 %v164
  %519 = vmatprep.subr.bf16.mxu0 0
  %520 = vmatpush2.bf16.msra.mxu0 0
  %521 = vmatprep.subr.bf16.mxu0 0
  %522 = vmatpush2.bf16.msra.mxu0 0
  %523 = vmatprep.subr.bf16.mxu0 0
  %524 = vmatpush2.bf16.msra.mxu0 0
  %525 = vmatprep.subr.bf16.mxu0 0
  %526 = vmatpush2.bf16.msra.mxu0 0
  %527 = vmatprep.subr.bf16.mxu0 0
  %528 = vmatpush2.bf16.msra.mxu0 0
  %529 = vmatprep.subr.bf16.mxu0 0
  %530 = vmatpush2.bf16.msra.mxu0 0
  %531 = vmatprep.subr.bf16.mxu0 0
  %532 = vmatpush2.bf16.msra.mxu0 0
  %533 = vmatprep.subr.bf16.mxu0 0
  %534 = vmatpush2.bf16.msra.mxu0 0
  %535 = vmatprep.mubr.bf16.mxu0 0
  %536 = vmatmul.mubr.bf16.gmra.mxu0 %v461
  %v537 = vpop.f32.mrf.mxu0
  %v538 = vadd.f32 0.0, %v537
  %v539 = vpop.f32.mrf.mxu0
  %v540 = vadd.f32 0.0, %v539
  %v541 = vpop.f32.mrf.mxu0
  %v542 = vpop.f32.mrf.mxu0
  %543 = vdwg.mxu0
  %v544 = vpack.c.bf16 %v497, %v497
  %v545 = vpack.c.bf16 %v499, %v499
  %v546 = vpack.c.bf16 %v538, %v538
  %v547 = vpack.c.bf16 %v540, %v540
  %v548 = vtanh.bf16.pop %v544
  %v549 = vmul.bf16 %v548, 1056980736
  %v550 = vadd.bf16 %v549, 1056980736
  %v551 = vunpack.c.l.bf16 %v550
  %v552 = vtanh.bf16.pop %v545
  %v553 = vmul.bf16 %v552, 1056980736
  %v554 = vadd.bf16 %v553, 1056980736
  %v555 = vunpack.c.l.bf16 %v554
  %v556 = vtanh.bf16.pop %v546
  %v557 = vunpack.c.l.bf16 %v556
  %v558 = vtanh.bf16.pop %v547
  %v559 = vmul.bf16 %v558, 1056980736
  %v560 = vadd.bf16 %v559, 1056980736
  %v561 = vunpack.c.l.bf16 %v560
  %v562 = vmul.f32 %v555, %v446
  %v563 = vmul.f32 %v551, %v557
  %v564 = vadd.f32 %v562, %v563
  %v565 = vpack.c.bf16 %v564, %v564
  %v566 = vtanh.bf16.pop %v565
  %v567 = vunpack.c.l.bf16 %v566
  %v568 = vmul.f32 %v561, %v567
  %v569 = vld [vmem:[%s0 + $0x3] sm:$0x1]
  %v570 = vlaneseq
  %v571 = vshrl.u32 %v570, 7
  %v572 = vsub.s32 0, %v571
  %v573 = vrot.slane %v569, %v572
  %575 = vbcast.lane.b32.xlu0 %v573, 256
  %v576 = vpop.permute.xlu0 %575
  %v577 = vsel %vm54, 1.0, %v568
  %v578 = vsel %vm53, %v576, %v577
  %v579 = vpack.c.bf16 %v578, %v578
  %580 = vmatprep.subr.bf16.mxu0 %v191
  %581 = vmatpush1.bf16.msra.mxu0 %v190
  %582 = vmatprep.subr.bf16.mxu0 %v187
  %583 = vmatpush1.bf16.msra.mxu0 %v186
  %584 = vmatprep.subr.bf16.mxu0 %v183
  %585 = vmatpush1.bf16.msra.mxu0 %v182
  %586 = vmatprep.subr.bf16.mxu0 %v179
  %587 = vmatpush1.bf16.msra.mxu0 %v178
  %588 = vmatprep.subr.bf16.mxu0 %v175
  %589 = vmatpush1.bf16.msra.mxu0 %v174
  %590 = vmatprep.subr.bf16.mxu0 %v171
  %591 = vmatpush1.bf16.msra.mxu0 %v170
  %592 = vmatprep.subr.bf16.mxu0 %v167
  %593 = vmatpush1.bf16.msra.mxu0 %v166
  %594 = vmatprep.subr.bf16.mxu0 %v163
  %595 = vmatpush1.bf16.msra.mxu0 %v162
  %596 = vmatprep.subr.bf16.mxu0 0
  %597 = vmatpush2.bf16.msra.mxu0 0
  %598 = vmatprep.subr.bf16.mxu0 0
  %599 = vmatpush2.bf16.msra.mxu0 0
  %600 = vmatprep.subr.bf16.mxu0 0
  %601 = vmatpush2.bf16.msra.mxu0 0
  %602 = vmatprep.subr.bf16.mxu0 0
  %603 = vmatpush2.bf16.msra.mxu0 0
  %604 = vmatprep.subr.bf16.mxu0 0
  %605 = vmatpush2.bf16.msra.mxu0 0
  %606 = vmatprep.subr.bf16.mxu0 0
  %607 = vmatpush2.bf16.msra.mxu0 0
  %608 = vmatprep.subr.bf16.mxu0 0
  %609 = vmatpush2.bf16.msra.mxu0 0
  %610 = vmatprep.subr.bf16.mxu0 0
  %611 = vmatpush2.bf16.msra.mxu0 0
  %612 = vmatprep.mubr.bf16.mxu0 0
  %613 = vmatmul.mubr.bf16.gmra.mxu0 %v579
  %v614 = vpop.f32.mrf.mxu0
  %v615 = vadd.f32 0.0, %v614
  %v616 = vpop.f32.mrf.mxu0
  %v617 = vadd.f32 0.0, %v616
  %v618 = vpop.f32.mrf.mxu0
  %v619 = vpop.f32.mrf.mxu0
  %620 = vdwg.mxu0
  %621 = vmatprep.subr.bf16.mxu0 %v193
  %622 = vmatpush1.bf16.msra.mxu0 %v192
  %623 = vmatprep.subr.bf16.mxu0 %v189
  %624 = vmatpush1.bf16.msra.mxu0 %v188
  %625 = vmatprep.subr.bf16.mxu0 %v185
  %626 = vmatpush1.bf16.msra.mxu0 %v184
  %627 = vmatprep.subr.bf16.mxu0 %v181
  %628 = vmatpush1.bf16.msra.mxu0 %v180
  %629 = vmatprep.subr.bf16.mxu0 %v177
  %630 = vmatpush1.bf16.msra.mxu0 %v176
  %631 = vmatprep.subr.bf16.mxu0 %v173
  %632 = vmatpush1.bf16.msra.mxu0 %v172
  %633 = vmatprep.subr.bf16.mxu0 %v169
  %634 = vmatpush1.bf16.msra.mxu0 %v168
  %635 = vmatprep.subr.bf16.mxu0 %v165
  %636 = vmatpush1.bf16.msra.mxu0 %v164
  %637 = vmatprep.subr.bf16.mxu0 0
  %638 = vmatpush2.bf16.msra.mxu0 0
  %639 = vmatprep.subr.bf16.mxu0 0
  %640 = vmatpush2.bf16.msra.mxu0 0
  %641 = vmatprep.subr.bf16.mxu0 0
  %642 = vmatpush2.bf16.msra.mxu0 0
  %643 = vmatprep.subr.bf16.mxu0 0
  %644 = vmatpush2.bf16.msra.mxu0 0
  %645 = vmatprep.subr.bf16.mxu0 0
  %646 = vmatpush2.bf16.msra.mxu0 0
  %647 = vmatprep.subr.bf16.mxu0 0
  %648 = vmatpush2.bf16.msra.mxu0 0
  %649 = vmatprep.subr.bf16.mxu0 0
  %650 = vmatpush2.bf16.msra.mxu0 0
  %651 = vmatprep.subr.bf16.mxu0 0
  %652 = vmatpush2.bf16.msra.mxu0 0
  %653 = vmatprep.mubr.bf16.mxu0 0
  %654 = vmatmul.mubr.bf16.gmra.mxu0 %v579
  %v655 = vpop.f32.mrf.mxu0
  %v656 = vadd.f32 0.0, %v655
  %v657 = vpop.f32.mrf.mxu0
  %v658 = vadd.f32 0.0, %v657
  %v659 = vpop.f32.mrf.mxu0
  %v660 = vpop.f32.mrf.mxu0
  %661 = vdwg.mxu0
  %v662 = vpack.c.bf16 %v615, %v615
  %v663 = vpack.c.bf16 %v617, %v617
  %v664 = vpack.c.bf16 %v656, %v656
  %v665 = vpack.c.bf16 %v658, %v658
  %v666 = vtanh.bf16.pop %v662
  %v667 = vmul.bf16 %v666, 1056980736
  %v668 = vadd.bf16 %v667, 1056980736
  %v669 = vunpack.c.l.bf16 %v668
  %v670 = vtanh.bf16.pop %v663
  %v671 = vmul.bf16 %v670, 1056980736
  %v672 = vadd.bf16 %v671, 1056980736
  %v673 = vunpack.c.l.bf16 %v672
  %v674 = vtanh.bf16.pop %v664
  %v675 = vunpack.c.l.bf16 %v674
  %v676 = vtanh.bf16.pop %v665
  %v677 = vmul.bf16 %v676, 1056980736
  %v678 = vadd.bf16 %v677, 1056980736
  %v679 = vunpack.c.l.bf16 %v678
  %v680 = vmul.f32 %v673, %v564
  %v681 = vmul.f32 %v669, %v675
  %v682 = vadd.f32 %v680, %v681
  %v683 = vpack.c.bf16 %v682, %v682
  %v684 = vtanh.bf16.pop %v683
  %v685 = vunpack.c.l.bf16 %v684
  %v686 = vmul.f32 %v679, %v685
  %v687 = vld [vmem:[%s0 + $0x4] sm:$0x1]
  %v688 = vlaneseq
  %v689 = vshrl.u32 %v688, 7
  %v690 = vsub.s32 0, %v689
  %v691 = vrot.slane %v687, %v690
  %693 = vbcast.lane.b32.xlu0 %v691, 256
  %v694 = vpop.permute.xlu0 %693
  %v695 = vsel %vm54, 1.0, %v686
  %v696 = vsel %vm53, %v694, %v695
  %v697 = vpack.c.bf16 %v696, %v696
  %698 = vmatprep.subr.bf16.mxu0 %v191
  %699 = vmatpush1.bf16.msra.mxu0 %v190
  %700 = vmatprep.subr.bf16.mxu0 %v187
  %701 = vmatpush1.bf16.msra.mxu0 %v186
  %702 = vmatprep.subr.bf16.mxu0 %v183
  %703 = vmatpush1.bf16.msra.mxu0 %v182
  %704 = vmatprep.subr.bf16.mxu0 %v179
  %705 = vmatpush1.bf16.msra.mxu0 %v178
  %706 = vmatprep.subr.bf16.mxu0 %v175
  %707 = vmatpush1.bf16.msra.mxu0 %v174
  %708 = vmatprep.subr.bf16.mxu0 %v171
  %709 = vmatpush1.bf16.msra.mxu0 %v170
  %710 = vmatprep.subr.bf16.mxu0 %v167
  %711 = vmatpush1.bf16.msra.mxu0 %v166
  %712 = vmatprep.subr.bf16.mxu0 %v163
  %713 = vmatpush1.bf16.msra.mxu0 %v162
  %714 = vmatprep.subr.bf16.mxu0 0
  %715 = vmatpush2.bf16.msra.mxu0 0
  %716 = vmatprep.subr.bf16.mxu0 0
  %717 = vmatpush2.bf16.msra.mxu0 0
  %718 = vmatprep.subr.bf16.mxu0 0
  %719 = vmatpush2.bf16.msra.mxu0 0
  %720 = vmatprep.subr.bf16.mxu0 0
  %721 = vmatpush2.bf16.msra.mxu0 0
  %722 = vmatprep.subr.bf16.mxu0 0
  %723 = vmatpush2.bf16.msra.mxu0 0
  %724 = vmatprep.subr.bf16.mxu0 0
  %725 = vmatpush2.bf16.msra.mxu0 0
  %726 = vmatprep.subr.bf16.mxu0 0
  %727 = vmatpush2.bf16.msra.mxu0 0
  %728 = vmatprep.subr.bf16.mxu0 0
  %729 = vmatpush2.bf16.msra.mxu0 0
  %730 = vmatprep.mubr.bf16.mxu0 0
  %731 = vmatmul.mubr.bf16.gmra.mxu0 %v697
  %v732 = vpop.f32.mrf.mxu0
  %v733 = vadd.f32 0.0, %v732
  %v734 = vpop.f32.mrf.mxu0
  %v735 = vadd.f32 0.0, %v734
  %v736 = vpop.f32.mrf.mxu0
  %v737 = vpop.f32.mrf.mxu0
  %738 = vdwg.mxu0
  %739 = vmatprep.subr.bf16.mxu0 %v193
  %740 = vmatpush1.bf16.msra.mxu0 %v192
  %741 = vmatprep.subr.bf16.mxu0 %v189
  %742 = vmatpush1.bf16.msra.mxu0 %v188
  %743 = vmatprep.subr.bf16.mxu0 %v185
  %744 = vmatpush1.bf16.msra.mxu0 %v184
  %745 = vmatprep.subr.bf16.mxu0 %v181
  %746 = vmatpush1.bf16.msra.mxu0 %v180
  %747 = vmatprep.subr.bf16.mxu0 %v177
  %748 = vmatpush1.bf16.msra.mxu0 %v176
  %749 = vmatprep.subr.bf16.mxu0 %v173
  %750 = vmatpush1.bf16.msra.mxu0 %v172
  %751 = vmatprep.subr.bf16.mxu0 %v169
  %752 = vmatpush1.bf16.msra.mxu0 %v168
  %753 = vmatprep.subr.bf16.mxu0 %v165
  %754 = vmatpush1.bf16.msra.mxu0 %v164
  %755 = vmatprep.subr.bf16.mxu0 0
  %756 = vmatpush2.bf16.msra.mxu0 0
  %757 = vmatprep.subr.bf16.mxu0 0
  %758 = vmatpush2.bf16.msra.mxu0 0
  %759 = vmatprep.subr.bf16.mxu0 0
  %760 = vmatpush2.bf16.msra.mxu0 0
  %761 = vmatprep.subr.bf16.mxu0 0
  %762 = vmatpush2.bf16.msra.mxu0 0
  %763 = vmatprep.subr.bf16.mxu0 0
  %764 = vmatpush2.bf16.msra.mxu0 0
  %765 = vmatprep.subr.bf16.mxu0 0
  %766 = vmatpush2.bf16.msra.mxu0 0
  %767 = vmatprep.subr.bf16.mxu0 0
  %768 = vmatpush2.bf16.msra.mxu0 0
  %769 = vmatprep.subr.bf16.mxu0 0
  %770 = vmatpush2.bf16.msra.mxu0 0
  %771 = vmatprep.mubr.bf16.mxu0 0
  %772 = vmatmul.mubr.bf16.gmra.mxu0 %v697
  %v773 = vpop.f32.mrf.mxu0
  %v774 = vadd.f32 0.0, %v773
  %v775 = vpop.f32.mrf.mxu0
  %v776 = vadd.f32 0.0, %v775
  %v777 = vpop.f32.mrf.mxu0
  %v778 = vpop.f32.mrf.mxu0
  %779 = vdwg.mxu0
  %v780 = vpack.c.bf16 %v733, %v733
  %v781 = vpack.c.bf16 %v735, %v735
  %v782 = vpack.c.bf16 %v774, %v774
  %v783 = vpack.c.bf16 %v776, %v776
  %v784 = vtanh.bf16.pop %v780
  %v785 = vmul.bf16 %v784, 1056980736
  %v786 = vadd.bf16 %v785, 1056980736
  %v787 = vunpack.c.l.bf16 %v786
  %v788 = vtanh.bf16.pop %v781
  %v789 = vmul.bf16 %v788, 1056980736
  %v790 = vadd.bf16 %v789, 1056980736
  %v791 = vunpack.c.l.bf16 %v790
  %v792 = vtanh.bf16.pop %v782
  %v793 = vunpack.c.l.bf16 %v792
  %v794 = vtanh.bf16.pop %v783
  %v795 = vmul.bf16 %v794, 1056980736
  %v796 = vadd.bf16 %v795, 1056980736
  %v797 = vunpack.c.l.bf16 %v796
  %v798 = vmul.f32 %v791, %v682
  %v799 = vmul.f32 %v787, %v793
  %v800 = vadd.f32 %v798, %v799
  %v801 = vpack.c.bf16 %v800, %v800
  %v802 = vtanh.bf16.pop %v801
  %v803 = vunpack.c.l.bf16 %v802
  %v804 = vmul.f32 %v797, %v803
  %v805 = vld [vmem:[%s0 + $0x5] sm:$0x1]
  %v806 = vlaneseq
  %v807 = vshrl.u32 %v806, 7
  %v808 = vsub.s32 0, %v807
  %v809 = vrot.slane %v805, %v808
  %811 = vbcast.lane.b32.xlu0 %v809, 256
  %v812 = vpop.permute.xlu0 %811
  %v813 = vsel %vm54, 1.0, %v804
  %v814 = vsel %vm53, %v812, %v813
  %v815 = vpack.c.bf16 %v814, %v814
  %816 = vmatprep.subr.bf16.mxu0 %v191
  %817 = vmatpush1.bf16.msra.mxu0 %v190
  %818 = vmatprep.subr.bf16.mxu0 %v187
  %819 = vmatpush1.bf16.msra.mxu0 %v186
  %820 = vmatprep.subr.bf16.mxu0 %v183
  %821 = vmatpush1.bf16.msra.mxu0 %v182
  %822 = vmatprep.subr.bf16.mxu0 %v179
  %823 = vmatpush1.bf16.msra.mxu0 %v178
  %824 = vmatprep.subr.bf16.mxu0 %v175
  %825 = vmatpush1.bf16.msra.mxu0 %v174
  %826 = vmatprep.subr.bf16.mxu0 %v171
  %827 = vmatpush1.bf16.msra.mxu0 %v170
  %828 = vmatprep.subr.bf16.mxu0 %v167
  %829 = vmatpush1.bf16.msra.mxu0 %v166
  %830 = vmatprep.subr.bf16.mxu0 %v163
  %831 = vmatpush1.bf16.msra.mxu0 %v162
  %832 = vmatprep.subr.bf16.mxu0 0
  %833 = vmatpush2.bf16.msra.mxu0 0
  %834 = vmatprep.subr.bf16.mxu0 0
  %835 = vmatpush2.bf16.msra.mxu0 0
  %836 = vmatprep.subr.bf16.mxu0 0
  %837 = vmatpush2.bf16.msra.mxu0 0
  %838 = vmatprep.subr.bf16.mxu0 0
  %839 = vmatpush2.bf16.msra.mxu0 0
  %840 = vmatprep.subr.bf16.mxu0 0
  %841 = vmatpush2.bf16.msra.mxu0 0
  %842 = vmatprep.subr.bf16.mxu0 0
  %843 = vmatpush2.bf16.msra.mxu0 0
  %844 = vmatprep.subr.bf16.mxu0 0
  %845 = vmatpush2.bf16.msra.mxu0 0
  %846 = vmatprep.subr.bf16.mxu0 0
  %847 = vmatpush2.bf16.msra.mxu0 0
  %848 = vmatprep.mubr.bf16.mxu0 0
  %849 = vmatmul.mubr.bf16.gmra.mxu0 %v815
  %v850 = vpop.f32.mrf.mxu0
  %v851 = vadd.f32 0.0, %v850
  %v852 = vpop.f32.mrf.mxu0
  %v853 = vadd.f32 0.0, %v852
  %v854 = vpop.f32.mrf.mxu0
  %v855 = vpop.f32.mrf.mxu0
  %856 = vdwg.mxu0
  %857 = vmatprep.subr.bf16.mxu0 %v193
  %858 = vmatpush1.bf16.msra.mxu0 %v192
  %859 = vmatprep.subr.bf16.mxu0 %v189
  %860 = vmatpush1.bf16.msra.mxu0 %v188
  %861 = vmatprep.subr.bf16.mxu0 %v185
  %862 = vmatpush1.bf16.msra.mxu0 %v184
  %863 = vmatprep.subr.bf16.mxu0 %v181
  %864 = vmatpush1.bf16.msra.mxu0 %v180
  %865 = vmatprep.subr.bf16.mxu0 %v177
  %866 = vmatpush1.bf16.msra.mxu0 %v176
  %867 = vmatprep.subr.bf16.mxu0 %v173
  %868 = vmatpush1.bf16.msra.mxu0 %v172
  %869 = vmatprep.subr.bf16.mxu0 %v169
  %870 = vmatpush1.bf16.msra.mxu0 %v168
  %871 = vmatprep.subr.bf16.mxu0 %v165
  %872 = vmatpush1.bf16.msra.mxu0 %v164
  %873 = vmatprep.subr.bf16.mxu0 0
  %874 = vmatpush2.bf16.msra.mxu0 0
  %875 = vmatprep.subr.bf16.mxu0 0
  %876 = vmatpush2.bf16.msra.mxu0 0
  %877 = vmatprep.subr.bf16.mxu0 0
  %878 = vmatpush2.bf16.msra.mxu0 0
  %879 = vmatprep.subr.bf16.mxu0 0
  %880 = vmatpush2.bf16.msra.mxu0 0
  %881 = vmatprep.subr.bf16.mxu0 0
  %882 = vmatpush2.bf16.msra.mxu0 0
  %883 = vmatprep.subr.bf16.mxu0 0
  %884 = vmatpush2.bf16.msra.mxu0 0
  %885 = vmatprep.subr.bf16.mxu0 0
  %886 = vmatpush2.bf16.msra.mxu0 0
  %887 = vmatprep.subr.bf16.mxu0 0
  %888 = vmatpush2.bf16.msra.mxu0 0
  %889 = vmatprep.mubr.bf16.mxu0 0
  %890 = vmatmul.mubr.bf16.gmra.mxu0 %v815
  %v891 = vpop.f32.mrf.mxu0
  %v892 = vadd.f32 0.0, %v891
  %v893 = vpop.f32.mrf.mxu0
  %v894 = vadd.f32 0.0, %v893
  %v895 = vpop.f32.mrf.mxu0
  %v896 = vpop.f32.mrf.mxu0
  %897 = vdwg.mxu0
  %v898 = vpack.c.bf16 %v851, %v851
  %v899 = vpack.c.bf16 %v853, %v853
  %v900 = vpack.c.bf16 %v892, %v892
  %v901 = vpack.c.bf16 %v894, %v894
  %v902 = vtanh.bf16.pop %v898
  %v903 = vmul.bf16 %v902, 1056980736
  %v904 = vadd.bf16 %v903, 1056980736
  %v905 = vunpack.c.l.bf16 %v904
  %v906 = vtanh.bf16.pop %v899
  %v907 = vmul.bf16 %v906, 1056980736
  %v908 = vadd.bf16 %v907, 1056980736
  %v909 = vunpack.c.l.bf16 %v908
  %v910 = vtanh.bf16.pop %v900
  %v911 = vunpack.c.l.bf16 %v910
  %v912 = vtanh.bf16.pop %v901
  %v913 = vmul.bf16 %v912, 1056980736
  %v914 = vadd.bf16 %v913, 1056980736
  %v915 = vunpack.c.l.bf16 %v914
  %v916 = vmul.f32 %v909, %v800
  %v917 = vmul.f32 %v905, %v911
  %v918 = vadd.f32 %v916, %v917
  %v919 = vpack.c.bf16 %v918, %v918
  %v920 = vtanh.bf16.pop %v919
  %v921 = vunpack.c.l.bf16 %v920
  %v922 = vmul.f32 %v915, %v921
  %v923 = vld [vmem:[%s0 + $0x6] sm:$0x1]
  %v924 = vlaneseq
  %v925 = vshrl.u32 %v924, 7
  %v926 = vsub.s32 0, %v925
  %v927 = vrot.slane %v923, %v926
  %929 = vbcast.lane.b32.xlu0 %v927, 256
  %v930 = vpop.permute.xlu0 %929
  %v931 = vsel %vm54, 1.0, %v922
  %v932 = vsel %vm53, %v930, %v931
  %v933 = vpack.c.bf16 %v932, %v932
  %934 = vmatprep.subr.bf16.mxu0 %v191
  %935 = vmatpush1.bf16.msra.mxu0 %v190
  %936 = vmatprep.subr.bf16.mxu0 %v187
  %937 = vmatpush1.bf16.msra.mxu0 %v186
  %938 = vmatprep.subr.bf16.mxu0 %v183
  %939 = vmatpush1.bf16.msra.mxu0 %v182
  %940 = vmatprep.subr.bf16.mxu0 %v179
  %941 = vmatpush1.bf16.msra.mxu0 %v178
  %942 = vmatprep.subr.bf16.mxu0 %v175
  %943 = vmatpush1.bf16.msra.mxu0 %v174
  %944 = vmatprep.subr.bf16.mxu0 %v171
  %945 = vmatpush1.bf16.msra.mxu0 %v170
  %946 = vmatprep.subr.bf16.mxu0 %v167
  %947 = vmatpush1.bf16.msra.mxu0 %v166
  %948 = vmatprep.subr.bf16.mxu0 %v163
  %949 = vmatpush1.bf16.msra.mxu0 %v162
  %950 = vmatprep.subr.bf16.mxu0 0
  %951 = vmatpush2.bf16.msra.mxu0 0
  %952 = vmatprep.subr.bf16.mxu0 0
  %953 = vmatpush2.bf16.msra.mxu0 0
  %954 = vmatprep.subr.bf16.mxu0 0
  %955 = vmatpush2.bf16.msra.mxu0 0
  %956 = vmatprep.subr.bf16.mxu0 0
  %957 = vmatpush2.bf16.msra.mxu0 0
  %958 = vmatprep.subr.bf16.mxu0 0
  %959 = vmatpush2.bf16.msra.mxu0 0
  %960 = vmatprep.subr.bf16.mxu0 0
  %961 = vmatpush2.bf16.msra.mxu0 0
  %962 = vmatprep.subr.bf16.mxu0 0
  %963 = vmatpush2.bf16.msra.mxu0 0
  %964 = vmatprep.subr.bf16.mxu0 0
  %965 = vmatpush2.bf16.msra.mxu0 0
  %966 = vmatprep.mubr.bf16.mxu0 0
  %967 = vmatmul.mubr.bf16.gmra.mxu0 %v933
  %v968 = vpop.f32.mrf.mxu0
  %v969 = vadd.f32 0.0, %v968
  %v970 = vpop.f32.mrf.mxu0
  %v971 = vadd.f32 0.0, %v970
  %v972 = vpop.f32.mrf.mxu0
  %v973 = vpop.f32.mrf.mxu0
  %974 = vdwg.mxu0
  %975 = vmatprep.subr.bf16.mxu0 %v193
  %976 = vmatpush1.bf16.msra.mxu0 %v192
  %977 = vmatprep.subr.bf16.mxu0 %v189
  %978 = vmatpush1.bf16.msra.mxu0 %v188
  %979 = vmatprep.subr.bf16.mxu0 %v185
  %980 = vmatpush1.bf16.msra.mxu0 %v184
  %981 = vmatprep.subr.bf16.mxu0 %v181
  %982 = vmatpush1.bf16.msra.mxu0 %v180
  %983 = vmatprep.subr.bf16.mxu0 %v177
  %984 = vmatpush1.bf16.msra.mxu0 %v176
  %985 = vmatprep.subr.bf16.mxu0 %v173
  %986 = vmatpush1.bf16.msra.mxu0 %v172
  %987 = vmatprep.subr.bf16.mxu0 %v169
  %988 = vmatpush1.bf16.msra.mxu0 %v168
  %989 = vmatprep.subr.bf16.mxu0 %v165
  %990 = vmatpush1.bf16.msra.mxu0 %v164
  %991 = vmatprep.subr.bf16.mxu0 0
  %992 = vmatpush2.bf16.msra.mxu0 0
  %993 = vmatprep.subr.bf16.mxu0 0
  %994 = vmatpush2.bf16.msra.mxu0 0
  %995 = vmatprep.subr.bf16.mxu0 0
  %996 = vmatpush2.bf16.msra.mxu0 0
  %997 = vmatprep.subr.bf16.mxu0 0
  %998 = vmatpush2.bf16.msra.mxu0 0
  %999 = vmatprep.subr.bf16.mxu0 0
  %1000 = vmatpush2.bf16.msra.mxu0 0
  %1001 = vmatprep.subr.bf16.mxu0 0
  %1002 = vmatpush2.bf16.msra.mxu0 0
  %1003 = vmatprep.subr.bf16.mxu0 0
  %1004 = vmatpush2.bf16.msra.mxu0 0
  %1005 = vmatprep.subr.bf16.mxu0 0
  %1006 = vmatpush2.bf16.msra.mxu0 0
  %1007 = vmatprep.mubr.bf16.mxu0 0
  %1008 = vmatmul.mubr.bf16.gmra.mxu0 %v933
  %v1009 = vpop.f32.mrf.mxu0
  %v1010 = vadd.f32 0.0, %v1009
  %v1011 = vpop.f32.mrf.mxu0
  %v1012 = vadd.f32 0.0, %v1011
  %v1013 = vpop.f32.mrf.mxu0
  %v1014 = vpop.f32.mrf.mxu0
  %1015 = vdwg.mxu0
  %v1016 = vpack.c.bf16 %v969, %v969
  %v1017 = vpack.c.bf16 %v971, %v971
  %v1018 = vpack.c.bf16 %v1010, %v1010
  %v1019 = vpack.c.bf16 %v1012, %v1012
  %v1020 = vtanh.bf16.pop %v1016
  %v1021 = vmul.bf16 %v1020, 1056980736
  %v1022 = vadd.bf16 %v1021, 1056980736
  %v1023 = vunpack.c.l.bf16 %v1022
  %v1024 = vtanh.bf16.pop %v1017
  %v1025 = vmul.bf16 %v1024, 1056980736
  %v1026 = vadd.bf16 %v1025, 1056980736
  %v1027 = vunpack.c.l.bf16 %v1026
  %v1028 = vtanh.bf16.pop %v1018
  %v1029 = vunpack.c.l.bf16 %v1028
  %v1030 = vtanh.bf16.pop %v1019
  %v1031 = vmul.bf16 %v1030, 1056980736
  %v1032 = vadd.bf16 %v1031, 1056980736
  %v1033 = vunpack.c.l.bf16 %v1032
  %v1034 = vmul.f32 %v1027, %v918
  %v1035 = vmul.f32 %v1023, %v1029
  %v1036 = vadd.f32 %v1034, %v1035
  %v1037 = vpack.c.bf16 %v1036, %v1036
  %v1038 = vtanh.bf16.pop %v1037
  %v1039 = vunpack.c.l.bf16 %v1038
  %v1040 = vmul.f32 %v1033, %v1039
  %v1041 = vld [vmem:[%s0 + $0x7] sm:$0x1]
  %v1042 = vlaneseq
  %v1043 = vshrl.u32 %v1042, 7
  %v1044 = vsub.s32 0, %v1043
  %v1045 = vrot.slane %v1041, %v1044
  %1047 = vbcast.lane.b32.xlu0 %v1045, 256
  %v1048 = vpop.permute.xlu0 %1047
  %v1049 = vsel %vm54, 1.0, %v1040
  %v1050 = vsel %vm53, %v1048, %v1049
  %v1051 = vpack.c.bf16 %v1050, %v1050
  %1052 = vmatprep.subr.bf16.mxu0 %v191
  %1053 = vmatpush1.bf16.msra.mxu0 %v190
  %1054 = vmatprep.subr.bf16.mxu0 %v187
  %1055 = vmatpush1.bf16.msra.mxu0 %v186
  %1056 = vmatprep.subr.bf16.mxu0 %v183
  %1057 = vmatpush1.bf16.msra.mxu0 %v182
  %1058 = vmatprep.subr.bf16.mxu0 %v179
  %1059 = vmatpush1.bf16.msra.mxu0 %v178
  %1060 = vmatprep.subr.bf16.mxu0 %v175
  %1061 = vmatpush1.bf16.msra.mxu0 %v174
  %1062 = vmatprep.subr.bf16.mxu0 %v171
  %1063 = vmatpush1.bf16.msra.mxu0 %v170
  %1064 = vmatprep.subr.bf16.mxu0 %v167
  %1065 = vmatpush1.bf16.msra.mxu0 %v166
  %1066 = vmatprep.subr.bf16.mxu0 %v163
  %1067 = vmatpush1.bf16.msra.mxu0 %v162
  %1068 = vmatprep.subr.bf16.mxu0 0
  %1069 = vmatpush2.bf16.msra.mxu0 0
  %1070 = vmatprep.subr.bf16.mxu0 0
  %1071 = vmatpush2.bf16.msra.mxu0 0
  %1072 = vmatprep.subr.bf16.mxu0 0
  %1073 = vmatpush2.bf16.msra.mxu0 0
  %1074 = vmatprep.subr.bf16.mxu0 0
  %1075 = vmatpush2.bf16.msra.mxu0 0
  %1076 = vmatprep.subr.bf16.mxu0 0
  %1077 = vmatpush2.bf16.msra.mxu0 0
  %1078 = vmatprep.subr.bf16.mxu0 0
  %1079 = vmatpush2.bf16.msra.mxu0 0
  %1080 = vmatprep.subr.bf16.mxu0 0
  %1081 = vmatpush2.bf16.msra.mxu0 0
  %1082 = vmatprep.subr.bf16.mxu0 0
  %1083 = vmatpush2.bf16.msra.mxu0 0
  %1084 = vmatprep.mubr.bf16.mxu0 0
  %1085 = vmatmul.mubr.bf16.gmra.mxu0 %v1051
  %v1086 = vpop.f32.mrf.mxu0
  %v1087 = vadd.f32 0.0, %v1086
  %v1088 = vpop.f32.mrf.mxu0
  %v1089 = vadd.f32 0.0, %v1088
  %v1090 = vpop.f32.mrf.mxu0
  %v1091 = vpop.f32.mrf.mxu0
  %1092 = vdwg.mxu0
  %1093 = vmatprep.subr.bf16.mxu0 %v193
  %1094 = vmatpush1.bf16.msra.mxu0 %v192
  %1095 = vmatprep.subr.bf16.mxu0 %v189
  %1096 = vmatpush1.bf16.msra.mxu0 %v188
  %1097 = vmatprep.subr.bf16.mxu0 %v185
  %1098 = vmatpush1.bf16.msra.mxu0 %v184
  %1099 = vmatprep.subr.bf16.mxu0 %v181
  %1100 = vmatpush1.bf16.msra.mxu0 %v180
  %1101 = vmatprep.subr.bf16.mxu0 %v177
  %1102 = vmatpush1.bf16.msra.mxu0 %v176
  %1103 = vmatprep.subr.bf16.mxu0 %v173
  %1104 = vmatpush1.bf16.msra.mxu0 %v172
  %1105 = vmatprep.subr.bf16.mxu0 %v169
  %1106 = vmatpush1.bf16.msra.mxu0 %v168
  %1107 = vmatprep.subr.bf16.mxu0 %v165
  %1108 = vmatpush1.bf16.msra.mxu0 %v164
  %1109 = vmatprep.subr.bf16.mxu0 0
  %1110 = vmatpush2.bf16.msra.mxu0 0
  %1111 = vmatprep.subr.bf16.mxu0 0
  %1112 = vmatpush2.bf16.msra.mxu0 0
  %1113 = vmatprep.subr.bf16.mxu0 0
  %1114 = vmatpush2.bf16.msra.mxu0 0
  %1115 = vmatprep.subr.bf16.mxu0 0
  %1116 = vmatpush2.bf16.msra.mxu0 0
  %1117 = vmatprep.subr.bf16.mxu0 0
  %1118 = vmatpush2.bf16.msra.mxu0 0
  %1119 = vmatprep.subr.bf16.mxu0 0
  %1120 = vmatpush2.bf16.msra.mxu0 0
  %1121 = vmatprep.subr.bf16.mxu0 0
  %1122 = vmatpush2.bf16.msra.mxu0 0
  %1123 = vmatprep.subr.bf16.mxu0 0
  %1124 = vmatpush2.bf16.msra.mxu0 0
  %1125 = vmatprep.mubr.bf16.mxu0 0
  %1126 = vmatmul.mubr.bf16.gmra.mxu0 %v1051
  %v1127 = vpop.f32.mrf.mxu0
  %v1128 = vadd.f32 0.0, %v1127
  %v1129 = vpop.f32.mrf.mxu0
  %v1130 = vadd.f32 0.0, %v1129
  %v1131 = vpop.f32.mrf.mxu0
  %v1132 = vpop.f32.mrf.mxu0
  %1133 = vdwg.mxu0
  %v1134 = vpack.c.bf16 %v1087, %v1087
  %v1135 = vpack.c.bf16 %v1089, %v1089
  %v1136 = vpack.c.bf16 %v1128, %v1128
  %v1137 = vpack.c.bf16 %v1130, %v1130
  %v1138 = vtanh.bf16.pop %v1134
  %v1139 = vmul.bf16 %v1138, 1056980736
  %v1140 = vadd.bf16 %v1139, 1056980736
  %v1141 = vunpack.c.l.bf16 %v1140
  %v1142 = vtanh.bf16.pop %v1135
  %v1143 = vmul.bf16 %v1142, 1056980736
  %v1144 = vadd.bf16 %v1143, 1056980736
  %v1145 = vunpack.c.l.bf16 %v1144
  %v1146 = vtanh.bf16.pop %v1136
  %v1147 = vunpack.c.l.bf16 %v1146
  %v1148 = vtanh.bf16.pop %v1137
  %v1149 = vmul.bf16 %v1148, 1056980736
  %v1150 = vadd.bf16 %v1149, 1056980736
  %v1151 = vunpack.c.l.bf16 %v1150
  %v1152 = vmul.f32 %v1145, %v1036
  %v1153 = vmul.f32 %v1141, %v1147
  %v1154 = vadd.f32 %v1152, %v1153
  %v1155 = vpack.c.bf16 %v1154, %v1154
  %v1156 = vtanh.bf16.pop %v1155
  %v1157 = vunpack.c.l.bf16 %v1156
  %v1158 = vmul.f32 %v1151, %v1157
  %v1159 = vpack.c.bf16 %v1158, %v1158
  %v1160 = vld [vmem:[%s2] sm:$0xf]
  %v1161 = vld [vmem:[%s2 + $0x4] sm:$0xf]
  %v1162 = vld [vmem:[%s2 + $0x8] sm:$0xf]
  %v1163 = vld [vmem:[%s2 + $0xc] sm:$0xf]
  %v1164 = vld [vmem:[%s2 + $0x10] sm:$0xf]
  %v1165 = vld [vmem:[%s2 + $0x14] sm:$0xf]
  %v1166 = vld [vmem:[%s2 + $0x18] sm:$0xf]
  %v1167 = vld [vmem:[%s2 + $0x1c] sm:$0xf]
  %v1168 = vld [vmem:[%s2 + $0x20] sm:$0xf]
  %v1169 = vld [vmem:[%s2 + $0x24] sm:$0xf]
  %v1170 = vld [vmem:[%s2 + $0x28] sm:$0xf]
  %v1171 = vld [vmem:[%s2 + $0x2c] sm:$0xf]
  %v1172 = vld [vmem:[%s2 + $0x30] sm:$0xf]
  %v1173 = vld [vmem:[%s2 + $0x34] sm:$0xf]
  %v1174 = vld [vmem:[%s2 + $0x38] sm:$0xf]
  %v1175 = vld [vmem:[%s2 + $0x3c] sm:$0xf]
  %v1176 = vld [vmem:[%s3] sm:$0x1]
  %v1178 = vlaneseq
  %v1179 = vshrl.u32 %v1178, 7
  %v1180 = vsub.s32 0, %v1179
  %v1181 = vrot.slane %v1176, %v1180
  %v1199 = vunpack.c.l.b16 %v1160
  %v1200 = vunpack.c.l.b16 %v1161
  %v1201 = vunpack.c.l.b16 %v1162
  %v1202 = vunpack.c.l.b16 %v1163
  %v1203 = vunpack.c.l.b16 %v1164
  %v1204 = vunpack.c.l.b16 %v1165
  %v1205 = vunpack.c.l.b16 %v1166
  %v1206 = vunpack.c.l.b16 %v1167
  %v1207 = vunpack.c.l.b16 %v1168
  %v1208 = vunpack.c.l.b16 %v1169
  %v1209 = vunpack.c.l.b16 %v1170
  %v1210 = vunpack.c.l.b16 %v1171
  %v1211 = vunpack.c.l.b16 %v1172
  %v1212 = vunpack.c.l.b16 %v1173
  %v1213 = vunpack.c.l.b16 %v1174
  %v1214 = vunpack.c.l.b16 %v1175
  %v1215 = vpack.c.b16 %v1200, %v1199
  %v1216 = vpack.c.b16 %v1202, %v1201
  %v1217 = vpack.c.b16 %v1204, %v1203
  %v1218 = vpack.c.b16 %v1206, %v1205
  %v1219 = vpack.c.b16 %v1208, %v1207
  %v1220 = vpack.c.b16 %v1210, %v1209
  %v1221 = vpack.c.b16 %v1212, %v1211
  %v1222 = vpack.c.b16 %v1214, %v1213
  %1231 = vmatprep.subr.bf16.mxu0 0
  %1232 = vmatpush1.bf16.msra.mxu0 %v1222
  %1233 = vmatprep.subr.bf16.mxu0 0
  %1234 = vmatpush1.bf16.msra.mxu0 %v1221
  %1235 = vmatprep.subr.bf16.mxu0 0
  %1236 = vmatpush1.bf16.msra.mxu0 %v1220
  %1237 = vmatprep.subr.bf16.mxu0 0
  %1238 = vmatpush1.bf16.msra.mxu0 %v1219
  %1239 = vmatprep.subr.bf16.mxu0 0
  %1240 = vmatpush1.bf16.msra.mxu0 %v1218
  %1241 = vmatprep.subr.bf16.mxu0 0
  %1242 = vmatpush1.bf16.msra.mxu0 %v1217
  %1243 = vmatprep.subr.bf16.mxu0 0
  %1244 = vmatpush1.bf16.msra.mxu0 %v1216
  %1245 = vmatprep.subr.bf16.mxu0 0
  %1246 = vmatpush1.bf16.msra.mxu0 %v1215
  %1247 = vmatprep.subr.bf16.mxu0 0
  %1248 = vmatpush2.bf16.msra.mxu0 0
  %1249 = vmatprep.subr.bf16.mxu0 0
  %1250 = vmatpush2.bf16.msra.mxu0 0
  %1251 = vmatprep.subr.bf16.mxu0 0
  %1252 = vmatpush2.bf16.msra.mxu0 0
  %1253 = vmatprep.subr.bf16.mxu0 0
  %1254 = vmatpush2.bf16.msra.mxu0 0
  %1255 = vmatprep.subr.bf16.mxu0 0
  %1256 = vmatpush2.bf16.msra.mxu0 0
  %1257 = vmatprep.subr.bf16.mxu0 0
  %1258 = vmatpush2.bf16.msra.mxu0 0
  %1259 = vmatprep.subr.bf16.mxu0 0
  %1260 = vmatpush2.bf16.msra.mxu0 0
  %1261 = vmatprep.subr.bf16.mxu0 0
  %1262 = vmatpush2.bf16.msra.mxu0 0
  %1263 = vmatprep.mubr.bf16.mxu0 0
  %1264 = vmatmul.mubr.bf16.gmra.mxu0 %v1159
  %v1265 = vpop.f32.mrf.mxu0
  %v1266 = vadd.f32 %v1181, %v1265
  %v1267 = vpop.f32.mrf.mxu0
  %v1268 = vpop.f32.mrf.mxu0
  %v1269 = vpop.f32.mrf.mxu0
  %1270 = vdwg.mxu0
  %1271 = vst [vmem:[%s4] sm:$0xff] %v1266
  // Predicated region
  $region18: #{lstm_net_forward.1} parent=0 // pred_check
    _
  $region19: #{lstm_net_forward.1} parent=0 // pred_check_branch
    %1273 = sbr.rel (0) target = $region21
  $region20: #{lstm_net_forward.1} parent=0 // pred_region
    _
  $region21: #{lstm_net_forward.1} parent=0 // pred_fallthru
    _
  // Predicated region
  $region22: #{lstm_net_forward.1} parent=0 // pred_check
    _
  $region23: #{lstm_net_forward.1} parent=0 // pred_check_branch
    %1275 = sbr.rel (0) target = $region25
  $region24: #{lstm_net_forward.1} parent=0 // pred_region
    _
  $region25: #{lstm_net_forward.1} parent=0 // pred_fallthru
    _

</llo_original>
